<compile_context>
chip_gen: v7x
topology: tpu7x:2x2x1
jax: 0.10.0
libtpu: 0.0.40
codegen_flags: <defaults>
</compile_context>

<pallas_src>
import functools

import jax
import jax.numpy as jnp
from jax import lax
from jax.experimental import pallas as pl
from jax.experimental.pallas import tpu as pltpu


# -----------------------------------------------------------------------------
# Glue: PyTorch-equivalent helpers in plain JAX
# -----------------------------------------------------------------------------
def image2patch(im, patch_size=5, stride=2):
    """Stand-in feature extractor: F.unfold(kernel=5, stride=2, pad=2) + view.

    NCHW input, requires C == 1 (single-channel medical images, as the module's
    encoder expects in_channels=1)."""
    N, C, H, W = im.shape
    assert C == 1, "patch feature stand-in only consistent for C == 1"
    pad = patch_size // 2
    padded = jnp.pad(im, ((0, 0), (0, 0), (pad, pad), (pad, pad)))
    out_h, out_w = H // stride, W // stride
    cols = []
    for ki in range(patch_size):
        for kj in range(patch_size):
            cols.append(padded[:, 0, ki:ki + stride * out_h:stride,
                                     kj:kj + stride * out_w:stride])
    return jnp.stack(cols, axis=1)  # (N, patch_size**2, H//stride, W//stride)


def crop_quarters(feat):
    """torch _crop_quarters: split H, W in half, concat the 4 quarters on batch."""
    _, _, H, W = feat.shape
    h2, w2 = round(H / 2), round(W / 2)
    return jnp.concatenate(
        [feat[..., 0:h2, 0:w2], feat[..., 0:h2, w2:],
         feat[..., h2:, 0:w2], feat[..., h2:, w2:]],
        axis=0,
    )


def compute_meshgrid(H, W):
    """Normalised (row, col) coordinate grid, shape (2, H*W)."""
    rows = jnp.arange(H, dtype=jnp.float32) / (H + 1)
    cols = jnp.arange(W, dtype=jnp.float32) / (W + 1)
    rr, cc = jnp.meshgrid(rows, cols, indexing="ij")
    return jnp.stack([rr, cc], axis=0).reshape(2, H * W)


def _spatial_cx(Hc, Wc, *, b, h, eps=1e-5):
    """Batch-invariant spatial contextual-similarity matrix (S, S); it depends only
    on the feature-map geometry, so it is computed once in the wrapper."""
    g = compute_meshgrid(Hc, Wc)                               # (2, S)
    sq = jnp.sum(g * g, axis=0, keepdims=True)                 # (1, S)
    ab = jnp.dot(g.T, g, preferred_element_type=jnp.float32)   # (S, S)
    d_sp = jnp.maximum(sq.T + sq - 2.0 * ab, 0.0)
    dmin = jnp.min(d_sp, axis=-1, keepdims=True)
    dt = d_sp / (dmin + eps)
    w = jnp.exp((b - dt) / h)
    return w / jnp.sum(w, axis=-1, keepdims=True)              # (S, S)


# -----------------------------------------------------------------------------
# Pallas kernel: per-sample CoBi contextual similarity scores (bt samples / step)
# -----------------------------------------------------------------------------
def _cobi_kernel(cxsp_ref, w_ref, it_ref, t_ref, out_ref, *, b, h, weight_sp, eps):
    # cxsp_ref : (S, S)               weight_sp * spatial-CX (hoisted, constant)
    # w_ref    : (n_pairs, C_pad, 2S) one-hot bf16 RHS (constant): broadcast engine
    # it_ref   : (bt, S, C_pad)       source features, bf16, channel axis padded
    # t_ref    : (bt, n_pairs, 2S)    target features packed [T[2p,:] | T[2p+1,:]]
    # out_ref  : (1, 1, bt)           per-sample contextual scores CS
    bt, S, _ = it_ref.shape
    n_pairs = w_ref.shape[0]
    inv_h = 1.0 / h
    inv_s = 1.0 / float(S)
    w_feat = 1.0 - weight_sp

    cx_sp_scaled = cxsp_ref[...]                                   # (S, S)
    lane_ids = lax.broadcasted_iota(jnp.int32, (1, bt), 1)

    def sample_body(n, scores):
        it = it_ref[n]                                             # (S, C_pad) bf16

        def chunk_body(p, acc):
            # One-hot MXU matmul = lane broadcast of channels 2p and 2p+1 into the
            # two 64-lane halves of a full 128-lane tile (no XLU broadcasts here).
            planes = jnp.dot(it, w_ref[p],
                             preferred_element_type=jnp.float32)  # (S, 2S) f32
            t_row = t_ref[n, p]                                    # (2S,) f32
            return acc + jnp.abs(planes - t_row[None, :])

        acc = lax.fori_loop(0, n_pairs, chunk_body,
                            jnp.zeros((S, 2 * S), jnp.float32), unroll=True)
        d_feat = acc[:, :S] + acc[:, S:]                           # fold halves (S, S)

        # Relative distance; exact reciprocal on the (S, 1) row-min (parity), the
        # softmax denominator uses the approximate EUP reciprocal with (1 - w_sp)
        # folded in; cx_sp already carries the weight_sp factor.
        dmin = jnp.min(d_feat, axis=-1, keepdims=True)
        dt = d_feat * (1.0 / (dmin + eps))
        w_exp = jnp.exp((b - dt) * inv_h)
        denom = jnp.sum(w_exp, axis=-1, keepdims=True)
        cx = w_exp * (w_feat * pl.reciprocal(denom, approx=True)) + cx_sp_scaled

        # TODO(synk): if the exact base-class reduction order differs (max over
        # source instead of target positions), swap the axis of this max.
        k_max = jnp.max(cx, axis=-1, keepdims=True)                # (S, 1)
        cs = jnp.sum(k_max, axis=0, keepdims=True) * inv_s         # (1, 1)
        return jnp.where(lane_ids == n, cs, scores)

    scores = lax.fori_loop(0, bt, sample_body, jnp.zeros((1, bt), jnp.float32))
    out_ref[0] = scores                                            # single store/step


def _pick_batch_tile(B):
    """Largest bt <= 8 dividing B such that the grid stays even and >= 4 steps
    (v7x megacore balance); falls back to >= 2 steps, then bt=1."""
    best = 1
    for bt in range(1, min(8, B) + 1):
        if B % bt == 0 and (B // bt) >= 4 and (B // bt) % 2 == 0:
            best = bt
    if best == 1:
        for bt in range(1, min(8, B) + 1):
            if B % bt == 0 and (B // bt) >= 2:
                best = bt
    return best


def _cobi_scores(cx_sp_scaled, feat_x, feat_y, *, b, h, weight_sp):
    """Per-sample CoBi contextual scores CS, shape (B,)."""
    B, C, Hc, Wc = feat_x.shape
    S = Hc * Wc
    n_pairs = (C + 1) // 2
    c_pad = ((2 * n_pairs + 7) // 8) * 8

    # Source features (B, S, C_pad): channel axis zero-padded so every DMA row is
    # 128-byte aligned; bf16 so the one-hot matmul runs as a single-pass bf16 MXU op.
    it = feat_x.reshape(B, C, S).transpose(0, 2, 1).astype(jnp.float32)
    it = jnp.pad(it, ((0, 0), (0, 0), (0, c_pad - C))).astype(jnp.bfloat16)

    # Target features packed channel-pair-wise along the lane axis:
    # t_pack[n, p, :] = [T[n, 2p, :] | T[n, 2p+1, :]]  (zero pad for the odd channel).
    t = feat_y.reshape(B, C, S).astype(jnp.float32)
    t = jnp.pad(t, ((0, 0), (0, 2 * n_pairs - C), (0, 0)))
    t_pack = t.reshape(B, n_pairs, 2 * S)

    # One-hot RHS that turns the MXU into the per-channel lane broadcaster:
    # (it @ w[p])[i, l] == it[i, 2p + (l >= S)].
    p_idx = jnp.arange(n_pairs)[:, None, None]
    k_idx = jnp.arange(c_pad)[None, :, None]
    l_idx = jnp.arange(2 * S)[None, None, :]
    w_onehot = (k_idx == 2 * p_idx + (l_idx >= S).astype(jnp.int32)
                ).astype(jnp.bfloat16)                            # (n_pairs, C_pad, 2S)

    bt = _pick_batch_tile(B)
    grid = B // bt
    kernel = functools.partial(_cobi_kernel, b=b, h=h, weight_sp=weight_sp, eps=1e-5)
    out = pl.pallas_call(
        kernel,
        out_shape=jax.ShapeDtypeStruct((grid, 1, bt), jnp.float32),
        grid=(grid,),
        in_specs=[
            pl.BlockSpec((S, S), lambda g: (0, 0)),                   # scaled spatial CX
            pl.BlockSpec((n_pairs, c_pad, 2 * S), lambda g: (0, 0, 0)),  # one-hot RHS
            pl.BlockSpec((bt, S, c_pad), lambda g: (g, 0, 0)),        # source features
            pl.BlockSpec((bt, n_pairs, 2 * S), lambda g: (g, 0, 0)),  # packed targets
        ],
        out_specs=pl.BlockSpec((1, 1, bt), lambda g: (g, 0, 0)),
        compiler_params=pltpu.CompilerParams(
            dimension_semantics=("parallel",)),
    )(cx_sp_scaled.astype(jnp.float32), w_onehot, it, t_pack)
    return out.reshape(B)


# -----------------------------------------------------------------------------
# VarAutoencoder_Loss forward (CoBi branch, default args of the module)
# -----------------------------------------------------------------------------
def var_autoencoder_loss(images, gt, *, crop_quarter=False, max_1d_size=10000,
                         b=1.0, h=0.5, weight_sp=0.1,
                         average_over_scales=True, weight=None):
    # `average_over_scales` / `weight` are no-ops for a single feature scale with
    # weight=None (matches the default call).
    # TODO(synk): frozen pretrained Encoder features replaced by the deterministic
    # 5x5 patch embedding below (checkpoint not available).
    feat_x = image2patch(images)
    feat_y = image2patch(gt)
    _, _, H, W = feat_y.shape

    if crop_quarter:
        feat_x = crop_quarters(feat_x)
        feat_y = crop_quarters(feat_y)

    if H * W > max_1d_size ** 2:
        # TODO(synk): _random_pooling branch not needed at these sizes.
        raise NotImplementedError("random pooling branch not implemented")

    _, _, Hc, Wc = feat_x.shape
    cx_sp_scaled = weight_sp * _spatial_cx(Hc, Wc, b=b, h=h)   # real hoist: batch-invariant
    cs = _cobi_scores(cx_sp_scaled, feat_x, feat_y, b=b, h=h, weight_sp=weight_sp)
    return jnp.mean(-jnp.log(cs + 1e-5))


# -----------------------------------------------------------------------------
# Pure-JAX reference (same math, full f32 broadcasts / true divides) for validation
# -----------------------------------------------------------------------------
def _reference_loss(images, gt, *, crop_quarter=False, b=1.0, h=0.5, weight_sp=0.1):
    fx, fy = image2patch(images), image2patch(gt)
    if crop_quarter:
        fx, fy = crop_quarters(fx), crop_quarters(fy)
    B, C, Hc, Wc = fx.shape
    S = Hc * Wc
    I = fx.reshape(B, C, S).astype(jnp.float32)
    T = fy.reshape(B, C, S).astype(jnp.float32)
    cx_sp = _spatial_cx(Hc, Wc, b=b, h=h)
    d = jnp.sum(jnp.abs(I[:, :, :, None] - T[:, :, None, :]), axis=1)     # (B,S,S)
    dt = d / (jnp.min(d, axis=-1, keepdims=True) + 1e-5)
    w = jnp.exp((b - dt) / h)
    cx_feat = w / jnp.sum(w, axis=-1, keepdims=True)
    cx = (1.0 - weight_sp) * cx_feat + weight_sp * cx_sp[None]
    cs = jnp.mean(jnp.max(cx, axis=-1), axis=-1)
    return jnp.mean(-jnp.log(cs + 1e-5))


# -----------------------------------------------------------------------------
if __name__ == "__main__":
    key = jax.random.PRNGKey(0)
    k1, k2 = jax.random.split(key)
    # 8 single-channel 32x32 images -> 25-dim patch features on a 16x16 grid,
    # crop_quarters -> effective batch 32, spatial 8x8 (S=64).  The kernel runs a
    # grid of 4 "parallel" steps, 8 samples per step (rolled fori), 13 channel-pair
    # MXU-broadcast chunks per sample on full 128-lane tiles.
    images = jax.random.normal(k1, (8, 1, 32, 32), dtype=jnp.float32)
    gt = images + 0.1 * jax.random.normal(k2, (8, 1, 32, 32), dtype=jnp.float32)

    loss = var_autoencoder_loss(images, gt, crop_quarter=True)
    loss = jax.block_until_ready(loss)
    assert loss.shape == () and bool(jnp.isfinite(loss))

    ref = jax.block_until_ready(_reference_loss(images, gt, crop_quarter=True))
    assert abs(float(loss) - float(ref)) <= 5e-2 * max(1.0, abs(float(ref))), (
        float(loss), float(ref))

    print("KERNEL_OK")
</pallas_src>

<mosaic_0001>
module attributes {stable_mosaic.version = 11 : i64} {
  func.func @_cobi_kernel(%arg0: i32, %arg1: memref<64x64xf32, #tpu.memory_space<vmem>>, %arg2: memref<13x32x128xbf16, #tpu.memory_space<vmem>>, %arg3: memref<8x64x32xbf16, #tpu.memory_space<vmem>>, %arg4: memref<8x13x128xf32, #tpu.memory_space<vmem>>, %arg5: memref<1x1x8xf32, #tpu.memory_space<vmem>>) attributes {dimension_semantics = [#tpu.dimension_semantics<parallel>], iteration_bounds = array<i64: 4>, scalar_prefetch = 0 : i64, scratch_operands = 0 : i64, tpu.core_type = #tpu.core_type<tc>, window_params = [{pipeline_mode = #tpu.pipeline_mode<synchronous>, transform_indices = @transform_0, window_bounds = array<i64: 64, 64>}, {pipeline_mode = #tpu.pipeline_mode<synchronous>, transform_indices = @transform_1, window_bounds = array<i64: 13, 32, 128>}, {transform_indices = @transform_2, window_bounds = array<i64: 8, 64, 32>}, {transform_indices = @transform_3, window_bounds = array<i64: 8, 13, 128>}, {transform_indices = @transform_4, window_bounds = array<i64: 1, 1, 8>}]} {
    %c0 = arith.constant 0 : index
    %c0_0 = arith.constant 0 : index
    %0 = vector.load %arg1[%c0, %c0_0] : memref<64x64xf32, #tpu.memory_space<vmem>>, vector<64x64xf32>
    %1 = tpu.iota {dimensions = array<i32: 1>} : vector<1x8xi32>
    %cst = arith.constant 0.000000e+00 : f32
    %2 = vector.broadcast %cst : f32 to vector<1x8xf32>
    %c0_i32 = arith.constant 0 : i32
    %c8_i32 = arith.constant 8 : i32
    %3 = arith.addi %c0_i32, %c8_i32 : i32
    %c1_i32 = arith.constant 1 : i32
    %4 = scf.for %arg6 = %c0_i32 to %3 step %c1_i32 iter_args(%arg7 = %2) -> (vector<1x8xf32>)  : i32 {
      %8 = arith.index_cast %arg6 : i32 to index
      %c0_5 = arith.constant 0 : index
      %c0_6 = arith.constant 0 : index
      %9 = vector.load %arg3[%8, %c0_5, %c0_6] : memref<8x64x32xbf16, #tpu.memory_space<vmem>>, vector<1x64x32xbf16>
      %10 = vector.shape_cast %9 : vector<1x64x32xbf16> to vector<64x32xbf16>
      %cst_7 = arith.constant 0.000000e+00 : f32
      %11 = vector.broadcast %cst_7 : f32 to vector<64x128xf32>
      %c0_i32_8 = arith.constant 0 : i32
      %12 = arith.index_cast %c0_i32_8 : i32 to index
      %c0_9 = arith.constant 0 : index
      %c0_10 = arith.constant 0 : index
      %13 = vector.load %arg2[%12, %c0_9, %c0_10] : memref<13x32x128xbf16, #tpu.memory_space<vmem>>, vector<1x32x128xbf16>
      %14 = vector.shape_cast %13 : vector<1x32x128xbf16> to vector<32x128xbf16>
      %cst_11 = arith.constant dense<0.000000e+00> : vector<64x128xf32>
      %15 = tpu.matmul %10, %14, %cst_11 {dimension_numbers = #tpu.dot_dimension_numbers<[1], [0], [0], [1], [0, 0, 1, 1], [], []>} : vector<64x32xbf16>, vector<32x128xbf16>, vector<64x128xf32> -> vector<64x128xf32>
      %16 = arith.index_cast %arg6 : i32 to index
      %17 = arith.index_cast %c0_i32_8 : i32 to index
      %c0_12 = arith.constant 0 : index
      %18 = vector.load %arg4[%16, %17, %c0_12] : memref<8x13x128xf32, #tpu.memory_space<vmem>>, vector<1x1x128xf32>
      %19 = vector.shape_cast %18 : vector<1x1x128xf32> to vector<128xf32>
      %20 = vector.shape_cast %19 : vector<128xf32> to vector<1x128xf32>
      %21 = vector.broadcast %20 : vector<1x128xf32> to vector<64x128xf32>
      %22 = arith.subf %15, %21 : vector<64x128xf32>
      %23 = math.absf %22 : vector<64x128xf32>
      %24 = arith.addf %11, %23 : vector<64x128xf32>
      %c1_i32_13 = arith.constant 1 : i32
      %25 = arith.index_cast %c1_i32_13 : i32 to index
      %c0_14 = arith.constant 0 : index
      %c0_15 = arith.constant 0 : index
      %26 = vector.load %arg2[%25, %c0_14, %c0_15] : memref<13x32x128xbf16, #tpu.memory_space<vmem>>, vector<1x32x128xbf16>
      %27 = vector.shape_cast %26 : vector<1x32x128xbf16> to vector<32x128xbf16>
      %cst_16 = arith.constant dense<0.000000e+00> : vector<64x128xf32>
      %28 = tpu.matmul %10, %27, %cst_16 {dimension_numbers = #tpu.dot_dimension_numbers<[1], [0], [0], [1], [0, 0, 1, 1], [], []>} : vector<64x32xbf16>, vector<32x128xbf16>, vector<64x128xf32> -> vector<64x128xf32>
      %29 = arith.index_cast %arg6 : i32 to index
      %30 = arith.index_cast %c1_i32_13 : i32 to index
      %c0_17 = arith.constant 0 : index
      %31 = vector.load %arg4[%29, %30, %c0_17] : memref<8x13x128xf32, #tpu.memory_space<vmem>>, vector<1x1x128xf32>
      %32 = vector.shape_cast %31 : vector<1x1x128xf32> to vector<128xf32>
      %33 = vector.shape_cast %32 : vector<128xf32> to vector<1x128xf32>
      %34 = vector.broadcast %33 : vector<1x128xf32> to vector<64x128xf32>
      %35 = arith.subf %28, %34 : vector<64x128xf32>
      %36 = math.absf %35 : vector<64x128xf32>
      %37 = arith.addf %24, %36 : vector<64x128xf32>
      %c2_i32 = arith.constant 2 : i32
      %38 = arith.index_cast %c2_i32 : i32 to index
      %c0_18 = arith.constant 0 : index
      %c0_19 = arith.constant 0 : index
      %39 = vector.load %arg2[%38, %c0_18, %c0_19] : memref<13x32x128xbf16, #tpu.memory_space<vmem>>, vector<1x32x128xbf16>
      %40 = vector.shape_cast %39 : vector<1x32x128xbf16> to vector<32x128xbf16>
      %cst_20 = arith.constant dense<0.000000e+00> : vector<64x128xf32>
      %41 = tpu.matmul %10, %40, %cst_20 {dimension_numbers = #tpu.dot_dimension_numbers<[1], [0], [0], [1], [0, 0, 1, 1], [], []>} : vector<64x32xbf16>, vector<32x128xbf16>, vector<64x128xf32> -> vector<64x128xf32>
      %42 = arith.index_cast %arg6 : i32 to index
      %43 = arith.index_cast %c2_i32 : i32 to index
      %c0_21 = arith.constant 0 : index
      %44 = vector.load %arg4[%42, %43, %c0_21] : memref<8x13x128xf32, #tpu.memory_space<vmem>>, vector<1x1x128xf32>
      %45 = vector.shape_cast %44 : vector<1x1x128xf32> to vector<128xf32>
      %46 = vector.shape_cast %45 : vector<128xf32> to vector<1x128xf32>
      %47 = vector.broadcast %46 : vector<1x128xf32> to vector<64x128xf32>
      %48 = arith.subf %41, %47 : vector<64x128xf32>
      %49 = math.absf %48 : vector<64x128xf32>
      %50 = arith.addf %37, %49 : vector<64x128xf32>
      %c3_i32 = arith.constant 3 : i32
      %51 = arith.index_cast %c3_i32 : i32 to index
      %c0_22 = arith.constant 0 : index
      %c0_23 = arith.constant 0 : index
      %52 = vector.load %arg2[%51, %c0_22, %c0_23] : memref<13x32x128xbf16, #tpu.memory_space<vmem>>, vector<1x32x128xbf16>
      %53 = vector.shape_cast %52 : vector<1x32x128xbf16> to vector<32x128xbf16>
      %cst_24 = arith.constant dense<0.000000e+00> : vector<64x128xf32>
      %54 = tpu.matmul %10, %53, %cst_24 {dimension_numbers = #tpu.dot_dimension_numbers<[1], [0], [0], [1], [0, 0, 1, 1], [], []>} : vector<64x32xbf16>, vector<32x128xbf16>, vector<64x128xf32> -> vector<64x128xf32>
      %55 = arith.index_cast %arg6 : i32 to index
      %56 = arith.index_cast %c3_i32 : i32 to index
      %c0_25 = arith.constant 0 : index
      %57 = vector.load %arg4[%55, %56, %c0_25] : memref<8x13x128xf32, #tpu.memory_space<vmem>>, vector<1x1x128xf32>
      %58 = vector.shape_cast %57 : vector<1x1x128xf32> to vector<128xf32>
      %59 = vector.shape_cast %58 : vector<128xf32> to vector<1x128xf32>
      %60 = vector.broadcast %59 : vector<1x128xf32> to vector<64x128xf32>
      %61 = arith.subf %54, %60 : vector<64x128xf32>
      %62 = math.absf %61 : vector<64x128xf32>
      %63 = arith.addf %50, %62 : vector<64x128xf32>
      %c4_i32 = arith.constant 4 : i32
      %64 = arith.index_cast %c4_i32 : i32 to index
      %c0_26 = arith.constant 0 : index
      %c0_27 = arith.constant 0 : index
      %65 = vector.load %arg2[%64, %c0_26, %c0_27] : memref<13x32x128xbf16, #tpu.memory_space<vmem>>, vector<1x32x128xbf16>
      %66 = vector.shape_cast %65 : vector<1x32x128xbf16> to vector<32x128xbf16>
      %cst_28 = arith.constant dense<0.000000e+00> : vector<64x128xf32>
      %67 = tpu.matmul %10, %66, %cst_28 {dimension_numbers = #tpu.dot_dimension_numbers<[1], [0], [0], [1], [0, 0, 1, 1], [], []>} : vector<64x32xbf16>, vector<32x128xbf16>, vector<64x128xf32> -> vector<64x128xf32>
      %68 = arith.index_cast %arg6 : i32 to index
      %69 = arith.index_cast %c4_i32 : i32 to index
      %c0_29 = arith.constant 0 : index
      %70 = vector.load %arg4[%68, %69, %c0_29] : memref<8x13x128xf32, #tpu.memory_space<vmem>>, vector<1x1x128xf32>
      %71 = vector.shape_cast %70 : vector<1x1x128xf32> to vector<128xf32>
      %72 = vector.shape_cast %71 : vector<128xf32> to vector<1x128xf32>
      %73 = vector.broadcast %72 : vector<1x128xf32> to vector<64x128xf32>
      %74 = arith.subf %67, %73 : vector<64x128xf32>
      %75 = math.absf %74 : vector<64x128xf32>
      %76 = arith.addf %63, %75 : vector<64x128xf32>
      %c5_i32 = arith.constant 5 : i32
      %77 = arith.index_cast %c5_i32 : i32 to index
      %c0_30 = arith.constant 0 : index
      %c0_31 = arith.constant 0 : index
      %78 = vector.load %arg2[%77, %c0_30, %c0_31] : memref<13x32x128xbf16, #tpu.memory_space<vmem>>, vector<1x32x128xbf16>
      %79 = vector.shape_cast %78 : vector<1x32x128xbf16> to vector<32x128xbf16>
      %cst_32 = arith.constant dense<0.000000e+00> : vector<64x128xf32>
      %80 = tpu.matmul %10, %79, %cst_32 {dimension_numbers = #tpu.dot_dimension_numbers<[1], [0], [0], [1], [0, 0, 1, 1], [], []>} : vector<64x32xbf16>, vector<32x128xbf16>, vector<64x128xf32> -> vector<64x128xf32>
      %81 = arith.index_cast %arg6 : i32 to index
      %82 = arith.index_cast %c5_i32 : i32 to index
      %c0_33 = arith.constant 0 : index
      %83 = vector.load %arg4[%81, %82, %c0_33] : memref<8x13x128xf32, #tpu.memory_space<vmem>>, vector<1x1x128xf32>
      %84 = vector.shape_cast %83 : vector<1x1x128xf32> to vector<128xf32>
      %85 = vector.shape_cast %84 : vector<128xf32> to vector<1x128xf32>
      %86 = vector.broadcast %85 : vector<1x128xf32> to vector<64x128xf32>
      %87 = arith.subf %80, %86 : vector<64x128xf32>
      %88 = math.absf %87 : vector<64x128xf32>
      %89 = arith.addf %76, %88 : vector<64x128xf32>
      %c6_i32 = arith.constant 6 : i32
      %90 = arith.index_cast %c6_i32 : i32 to index
      %c0_34 = arith.constant 0 : index
      %c0_35 = arith.constant 0 : index
      %91 = vector.load %arg2[%90, %c0_34, %c0_35] : memref<13x32x128xbf16, #tpu.memory_space<vmem>>, vector<1x32x128xbf16>
      %92 = vector.shape_cast %91 : vector<1x32x128xbf16> to vector<32x128xbf16>
      %cst_36 = arith.constant dense<0.000000e+00> : vector<64x128xf32>
      %93 = tpu.matmul %10, %92, %cst_36 {dimension_numbers = #tpu.dot_dimension_numbers<[1], [0], [0], [1], [0, 0, 1, 1], [], []>} : vector<64x32xbf16>, vector<32x128xbf16>, vector<64x128xf32> -> vector<64x128xf32>
      %94 = arith.index_cast %arg6 : i32 to index
      %95 = arith.index_cast %c6_i32 : i32 to index
      %c0_37 = arith.constant 0 : index
      %96 = vector.load %arg4[%94, %95, %c0_37] : memref<8x13x128xf32, #tpu.memory_space<vmem>>, vector<1x1x128xf32>
      %97 = vector.shape_cast %96 : vector<1x1x128xf32> to vector<128xf32>
      %98 = vector.shape_cast %97 : vector<128xf32> to vector<1x128xf32>
      %99 = vector.broadcast %98 : vector<1x128xf32> to vector<64x128xf32>
      %100 = arith.subf %93, %99 : vector<64x128xf32>
      %101 = math.absf %100 : vector<64x128xf32>
      %102 = arith.addf %89, %101 : vector<64x128xf32>
      %c7_i32 = arith.constant 7 : i32
      %103 = arith.index_cast %c7_i32 : i32 to index
      %c0_38 = arith.constant 0 : index
      %c0_39 = arith.constant 0 : index
      %104 = vector.load %arg2[%103, %c0_38, %c0_39] : memref<13x32x128xbf16, #tpu.memory_space<vmem>>, vector<1x32x128xbf16>
      %105 = vector.shape_cast %104 : vector<1x32x128xbf16> to vector<32x128xbf16>
      %cst_40 = arith.constant dense<0.000000e+00> : vector<64x128xf32>
      %106 = tpu.matmul %10, %105, %cst_40 {dimension_numbers = #tpu.dot_dimension_numbers<[1], [0], [0], [1], [0, 0, 1, 1], [], []>} : vector<64x32xbf16>, vector<32x128xbf16>, vector<64x128xf32> -> vector<64x128xf32>
      %107 = arith.index_cast %arg6 : i32 to index
      %108 = arith.index_cast %c7_i32 : i32 to index
      %c0_41 = arith.constant 0 : index
      %109 = vector.load %arg4[%107, %108, %c0_41] : memref<8x13x128xf32, #tpu.memory_space<vmem>>, vector<1x1x128xf32>
      %110 = vector.shape_cast %109 : vector<1x1x128xf32> to vector<128xf32>
      %111 = vector.shape_cast %110 : vector<128xf32> to vector<1x128xf32>
      %112 = vector.broadcast %111 : vector<1x128xf32> to vector<64x128xf32>
      %113 = arith.subf %106, %112 : vector<64x128xf32>
      %114 = math.absf %113 : vector<64x128xf32>
      %115 = arith.addf %102, %114 : vector<64x128xf32>
      %c8_i32_42 = arith.constant 8 : i32
      %116 = arith.index_cast %c8_i32_42 : i32 to index
      %c0_43 = arith.constant 0 : index
      %c0_44 = arith.constant 0 : index
      %117 = vector.load %arg2[%116, %c0_43, %c0_44] : memref<13x32x128xbf16, #tpu.memory_space<vmem>>, vector<1x32x128xbf16>
      %118 = vector.shape_cast %117 : vector<1x32x128xbf16> to vector<32x128xbf16>
      %cst_45 = arith.constant dense<0.000000e+00> : vector<64x128xf32>
      %119 = tpu.matmul %10, %118, %cst_45 {dimension_numbers = #tpu.dot_dimension_numbers<[1], [0], [0], [1], [0, 0, 1, 1], [], []>} : vector<64x32xbf16>, vector<32x128xbf16>, vector<64x128xf32> -> vector<64x128xf32>
      %120 = arith.index_cast %arg6 : i32 to index
      %121 = arith.index_cast %c8_i32_42 : i32 to index
      %c0_46 = arith.constant 0 : index
      %122 = vector.load %arg4[%120, %121, %c0_46] : memref<8x13x128xf32, #tpu.memory_space<vmem>>, vector<1x1x128xf32>
      %123 = vector.shape_cast %122 : vector<1x1x128xf32> to vector<128xf32>
      %124 = vector.shape_cast %123 : vector<128xf32> to vector<1x128xf32>
      %125 = vector.broadcast %124 : vector<1x128xf32> to vector<64x128xf32>
      %126 = arith.subf %119, %125 : vector<64x128xf32>
      %127 = math.absf %126 : vector<64x128xf32>
      %128 = arith.addf %115, %127 : vector<64x128xf32>
      %c9_i32 = arith.constant 9 : i32
      %129 = arith.index_cast %c9_i32 : i32 to index
      %c0_47 = arith.constant 0 : index
      %c0_48 = arith.constant 0 : index
      %130 = vector.load %arg2[%129, %c0_47, %c0_48] : memref<13x32x128xbf16, #tpu.memory_space<vmem>>, vector<1x32x128xbf16>
      %131 = vector.shape_cast %130 : vector<1x32x128xbf16> to vector<32x128xbf16>
      %cst_49 = arith.constant dense<0.000000e+00> : vector<64x128xf32>
      %132 = tpu.matmul %10, %131, %cst_49 {dimension_numbers = #tpu.dot_dimension_numbers<[1], [0], [0], [1], [0, 0, 1, 1], [], []>} : vector<64x32xbf16>, vector<32x128xbf16>, vector<64x128xf32> -> vector<64x128xf32>
      %133 = arith.index_cast %arg6 : i32 to index
      %134 = arith.index_cast %c9_i32 : i32 to index
      %c0_50 = arith.constant 0 : index
      %135 = vector.load %arg4[%133, %134, %c0_50] : memref<8x13x128xf32, #tpu.memory_space<vmem>>, vector<1x1x128xf32>
      %136 = vector.shape_cast %135 : vector<1x1x128xf32> to vector<128xf32>
      %137 = vector.shape_cast %136 : vector<128xf32> to vector<1x128xf32>
      %138 = vector.broadcast %137 : vector<1x128xf32> to vector<64x128xf32>
      %139 = arith.subf %132, %138 : vector<64x128xf32>
      %140 = math.absf %139 : vector<64x128xf32>
      %141 = arith.addf %128, %140 : vector<64x128xf32>
      %c10_i32 = arith.constant 10 : i32
      %142 = arith.index_cast %c10_i32 : i32 to index
      %c0_51 = arith.constant 0 : index
      %c0_52 = arith.constant 0 : index
      %143 = vector.load %arg2[%142, %c0_51, %c0_52] : memref<13x32x128xbf16, #tpu.memory_space<vmem>>, vector<1x32x128xbf16>
      %144 = vector.shape_cast %143 : vector<1x32x128xbf16> to vector<32x128xbf16>
      %cst_53 = arith.constant dense<0.000000e+00> : vector<64x128xf32>
      %145 = tpu.matmul %10, %144, %cst_53 {dimension_numbers = #tpu.dot_dimension_numbers<[1], [0], [0], [1], [0, 0, 1, 1], [], []>} : vector<64x32xbf16>, vector<32x128xbf16>, vector<64x128xf32> -> vector<64x128xf32>
      %146 = arith.index_cast %arg6 : i32 to index
      %147 = arith.index_cast %c10_i32 : i32 to index
      %c0_54 = arith.constant 0 : index
      %148 = vector.load %arg4[%146, %147, %c0_54] : memref<8x13x128xf32, #tpu.memory_space<vmem>>, vector<1x1x128xf32>
      %149 = vector.shape_cast %148 : vector<1x1x128xf32> to vector<128xf32>
      %150 = vector.shape_cast %149 : vector<128xf32> to vector<1x128xf32>
      %151 = vector.broadcast %150 : vector<1x128xf32> to vector<64x128xf32>
      %152 = arith.subf %145, %151 : vector<64x128xf32>
      %153 = math.absf %152 : vector<64x128xf32>
      %154 = arith.addf %141, %153 : vector<64x128xf32>
      %c11_i32 = arith.constant 11 : i32
      %155 = arith.index_cast %c11_i32 : i32 to index
      %c0_55 = arith.constant 0 : index
      %c0_56 = arith.constant 0 : index
      %156 = vector.load %arg2[%155, %c0_55, %c0_56] : memref<13x32x128xbf16, #tpu.memory_space<vmem>>, vector<1x32x128xbf16>
      %157 = vector.shape_cast %156 : vector<1x32x128xbf16> to vector<32x128xbf16>
      %cst_57 = arith.constant dense<0.000000e+00> : vector<64x128xf32>
      %158 = tpu.matmul %10, %157, %cst_57 {dimension_numbers = #tpu.dot_dimension_numbers<[1], [0], [0], [1], [0, 0, 1, 1], [], []>} : vector<64x32xbf16>, vector<32x128xbf16>, vector<64x128xf32> -> vector<64x128xf32>
      %159 = arith.index_cast %arg6 : i32 to index
      %160 = arith.index_cast %c11_i32 : i32 to index
      %c0_58 = arith.constant 0 : index
      %161 = vector.load %arg4[%159, %160, %c0_58] : memref<8x13x128xf32, #tpu.memory_space<vmem>>, vector<1x1x128xf32>
      %162 = vector.shape_cast %161 : vector<1x1x128xf32> to vector<128xf32>
      %163 = vector.shape_cast %162 : vector<128xf32> to vector<1x128xf32>
      %164 = vector.broadcast %163 : vector<1x128xf32> to vector<64x128xf32>
      %165 = arith.subf %158, %164 : vector<64x128xf32>
      %166 = math.absf %165 : vector<64x128xf32>
      %167 = arith.addf %154, %166 : vector<64x128xf32>
      %c12_i32 = arith.constant 12 : i32
      %168 = arith.index_cast %c12_i32 : i32 to index
      %c0_59 = arith.constant 0 : index
      %c0_60 = arith.constant 0 : index
      %169 = vector.load %arg2[%168, %c0_59, %c0_60] : memref<13x32x128xbf16, #tpu.memory_space<vmem>>, vector<1x32x128xbf16>
      %170 = vector.shape_cast %169 : vector<1x32x128xbf16> to vector<32x128xbf16>
      %cst_61 = arith.constant dense<0.000000e+00> : vector<64x128xf32>
      %171 = tpu.matmul %10, %170, %cst_61 {dimension_numbers = #tpu.dot_dimension_numbers<[1], [0], [0], [1], [0, 0, 1, 1], [], []>} : vector<64x32xbf16>, vector<32x128xbf16>, vector<64x128xf32> -> vector<64x128xf32>
      %172 = arith.index_cast %arg6 : i32 to index
      %173 = arith.index_cast %c12_i32 : i32 to index
      %c0_62 = arith.constant 0 : index
      %174 = vector.load %arg4[%172, %173, %c0_62] : memref<8x13x128xf32, #tpu.memory_space<vmem>>, vector<1x1x128xf32>
      %175 = vector.shape_cast %174 : vector<1x1x128xf32> to vector<128xf32>
      %176 = vector.shape_cast %175 : vector<128xf32> to vector<1x128xf32>
      %177 = vector.broadcast %176 : vector<1x128xf32> to vector<64x128xf32>
      %178 = arith.subf %171, %177 : vector<64x128xf32>
      %179 = math.absf %178 : vector<64x128xf32>
      %180 = arith.addf %167, %179 : vector<64x128xf32>
      %c13_i32 = arith.constant 13 : i32
      %181 = vector.extract_strided_slice %180 {offsets = [0, 0], sizes = [64, 64], strides = [1, 1]} : vector<64x128xf32> to vector<64x64xf32>
      %182 = vector.extract_strided_slice %180 {offsets = [0, 64], sizes = [64, 64], strides = [1, 1]} : vector<64x128xf32> to vector<64x64xf32>
      %183 = arith.addf %181, %182 : vector<64x64xf32>
      %cst_63 = arith.constant dense<0x7F800000> : vector<64xf32>
      %184 = vector.multi_reduction <minimumf>, %183, %cst_63 [1] : vector<64x64xf32> to vector<64xf32>
      %185 = vector.shape_cast %184 : vector<64xf32> to vector<64x1xf32>
      %cst_64 = arith.constant 9.99999974E-6 : f32
      %186 = vector.broadcast %cst_64 : f32 to vector<64x1xf32>
      %187 = arith.addf %185, %186 : vector<64x1xf32>
      %cst_65 = arith.constant 1.000000e+00 : f32
      %188 = vector.broadcast %cst_65 : f32 to vector<64x1xf32>
      %189 = arith.divf %188, %187 : vector<64x1xf32>
      %190 = vector.broadcast %189 : vector<64x1xf32> to vector<64x64xf32>
      %191 = arith.mulf %183, %190 : vector<64x64xf32>
      %cst_66 = arith.constant 1.000000e+00 : f32
      %192 = vector.broadcast %cst_66 : f32 to vector<64x64xf32>
      %193 = arith.subf %192, %191 : vector<64x64xf32>
      %cst_67 = arith.constant 2.000000e+00 : f32
      %194 = vector.broadcast %cst_67 : f32 to vector<64x64xf32>
      %195 = arith.mulf %193, %194 : vector<64x64xf32>
      %196 = math.exp %195 : vector<64x64xf32>
      %cst_68 = arith.constant dense<0.000000e+00> : vector<64xf32>
      %197 = vector.multi_reduction <add>, %196, %cst_68 [1] : vector<64x64xf32> to vector<64xf32>
      %198 = vector.shape_cast %197 : vector<64xf32> to vector<64x1xf32>
      %199 = tpu.reciprocal %198 {approx = true} : vector<64x1xf32> -> vector<64x1xf32>
      %cst_69 = arith.constant 0.899999976 : f32
      %200 = vector.broadcast %cst_69 : f32 to vector<64x1xf32>
      %201 = arith.mulf %200, %199 : vector<64x1xf32>
      %202 = vector.broadcast %201 : vector<64x1xf32> to vector<64x64xf32>
      %203 = arith.mulf %196, %202 : vector<64x64xf32>
      %204 = arith.addf %203, %0 : vector<64x64xf32>
      %cst_70 = arith.constant dense<0xFF800000> : vector<64xf32>
      %205 = vector.multi_reduction <maximumf>, %204, %cst_70 [1] : vector<64x64xf32> to vector<64xf32>
      %206 = vector.shape_cast %205 : vector<64xf32> to vector<64x1xf32>
      %cst_71 = arith.constant dense<0.000000e+00> : vector<1xf32>
      %207 = vector.multi_reduction <add>, %206, %cst_71 [0] : vector<64x1xf32> to vector<1xf32>
      %208 = vector.shape_cast %207 : vector<1xf32> to vector<1x1xf32>
      %cst_72 = arith.constant 1.562500e-02 : f32
      %209 = vector.broadcast %cst_72 : f32 to vector<1x1xf32>
      %210 = arith.mulf %208, %209 : vector<1x1xf32>
      %211 = vector.broadcast %arg6 : i32 to vector<1x8xi32>
      %212 = arith.cmpi eq, %1, %211 : vector<1x8xi32>
      %213 = vector.shape_cast %210 : vector<1x1xf32> to vector<1x1xf32>
      %214 = vector.broadcast %213 : vector<1x1xf32> to vector<1x8xf32>
      %215 = arith.select %212, %214, %arg7 : vector<1x8xi1>, vector<1x8xf32>
      scf.yield %215 : vector<1x8xf32>
    }
    %c8_i32_1 = arith.constant 8 : i32
    %c0_2 = arith.constant 0 : index
    %c0_3 = arith.constant 0 : index
    %c0_4 = arith.constant 0 : index
    %5 = vector.load %arg5[%c0_2, %c0_3, %c0_4] : memref<1x1x8xf32, #tpu.memory_space<vmem>>, vector<1x1x8xf32>
    %6 = vector.shape_cast %5 : vector<1x1x8xf32> to vector<1x8xf32>
    %7 = vector.shape_cast %4 : vector<1x8xf32> to vector<1x1x8xf32>
    tpu.vector_store %arg5[%c0_2, %c0_3, %c0_4], %7 {strides = array<i32>} : memref<1x1x8xf32, #tpu.memory_space<vmem>>, vector<1x1x8xf32>,
    return
  }
  func.func @transform_0(%arg0: i32) -> (i32, i32) {
    %c0_i32 = arith.constant 0 : i32
    %c0_i32_0 = arith.constant 0 : i32
    %c0_i32_1 = arith.constant 0 : i32
    return %c0_i32, %c0_i32_0 : i32, i32
  }
  func.func @transform_1(%arg0: i32) -> (i32, i32, i32) {
    %c0_i32 = arith.constant 0 : i32
    %c0_i32_0 = arith.constant 0 : i32
    %c0_i32_1 = arith.constant 0 : i32
    %c0_i32_2 = arith.constant 0 : i32
    return %c0_i32, %c0_i32_0, %c0_i32_1 : i32, i32, i32
  }
  func.func @transform_2(%arg0: i32) -> (i32, i32, i32) {
    %c0_i32 = arith.constant 0 : i32
    %c0_i32_0 = arith.constant 0 : i32
    %c0_i32_1 = arith.constant 0 : i32
    return %arg0, %c0_i32, %c0_i32_0 : i32, i32, i32
  }
  func.func @transform_3(%arg0: i32) -> (i32, i32, i32) {
    %c0_i32 = arith.constant 0 : i32
    %c0_i32_0 = arith.constant 0 : i32
    %c0_i32_1 = arith.constant 0 : i32
    return %arg0, %c0_i32, %c0_i32_0 : i32, i32, i32
  }
  func.func @transform_4(%arg0: i32) -> (i32, i32, i32) {
    %c0_i32 = arith.constant 0 : i32
    %c0_i32_0 = arith.constant 0 : i32
    %c0_i32_1 = arith.constant 0 : i32
    return %arg0, %c0_i32, %c0_i32_0 : i32, i32, i32
  }
}

</mosaic_0001>

<llo_original>
// kernel: tpu_custom_call.1
$region0: #{tpu_custom_call.1}
  #allocation0 [shape = 'u32[]', space=smem, size = 0x4, offset = 0x4, fixed_abs, tag = 'smem constant byte address 0x4 - core index']
  #allocation1 [shape = 'u32[144,128]{1,0:T(1,128)}', space=vmem, size = 0x12000, scoped, tag = 'internal scratch']
  %s0 = inlined_call_operand.vmem [shape: f32[64,64], index: 0, kind: input, shape index: {}]
  %s1 = inlined_call_operand.vmem [shape: bf16[13,32,128], index: 1, kind: input, shape index: {}]
  %s2 = inlined_call_operand.vmem [shape: bf16[32,64,32], index: 2, kind: input, shape index: {}]
  %s3 = inlined_call_operand.vmem [shape: f32[32,13,128], index: 3, kind: input, shape index: {}]
  %s4 = inlined_call_operand.hbm [shape: f32[4,1,8], index: 4, kind: output, shape index: {}]
  %s5 = sld [smem:[#allocation0]]
  $region56: #{tpu_custom_call.1} parent=0
    _
  %s7 = ssub.s32 1, %s5
  %s8 = scalar_select 0, %s7, %s5
  $region1: #{tpu_custom_call.1} parent=0
    #allocation2 [shape = 'u8[1024]{0}', space=vmem, size = 0x400, scoped, tag = 'output window, operand 0']
    #allocation3 [shape = 's32[2]{0}', space=sflag, size = 0x8, scoped, tag = 'scoped memory for tpu_custom_call.1']
    %9 = vsyncpa [#allocation3], 0
    %s10 = scalar_lea.sflag [#allocation3], 1
    %11 = vsyncpa %s10, 0
    loop: start=0, step=1, limit=6
    $region2: #{tpu_custom_call.1} parent=1 // loop_pre_header
      _
    $region3: #{tpu_custom_call.1} parent=1 // loop_header
      %s13 = sphi 0, %s17
      %p14 = scmp.ge.s32.totalorder %s13, 6
      %s21 = sphi 0, %s21
      %s23 = sphi 0, %s21
      %s24 = sphi 0, %s23
      %s38 = sphi 0, %s24
      %s42 = sphi 0, %s42
      %s44 = sphi 0, %s42
      %s45 = sphi 0, %s44
      %s59 = sphi 0, %s45
      %s65 = sphi 0, %s67
      %s68 = sphi 0, %s65
      %s69 = sphi 0, %s68
      %s85 = sphi 0, %s69
      %s91 = sphi 0, %s93
      %s94 = sphi 0, %s91
      %s95 = sphi 0, %s94
      %s111 = sphi 0, %s95
      %s117 = sphi 0, %s119
      %s120 = sphi 0, %s117
      %s121 = sphi 0, %s120
      %s137 = sphi 0, %s121
    $region4: #{tpu_custom_call.1} parent=1 // loop_header_branch
      %16 = sbr.rel (%p14) target = $region8
    $region5: #{tpu_custom_call.1} parent=1 // loop_body
      %s18 = ssub.s32 %s13, 1
      %s19 = ssub.s32 %s13, 2
      %s20 = sadd.s32 %s13, 1
      %s22 = sadd.s32 %s21, 1
      %p25 = scmp.eq.s32.totalorder %s13, 3
      %p26 = scmp.ne.s32.totalorder %s21, %s23
      %p27 = scmp.eq.s32.totalorder %s13, 0
      %p28 = por %p26, %p27
      %p29 = scmp.ne.s32.totalorder %s21, %s23
      %p30 = scmp.eq.s32.totalorder %s18, 3
      %p31 = por %p29, %p30
      %p32 = scmp.ne.s32.totalorder %s23, %s24
      %p33 = scmp.eq.s32.totalorder %s18, 0
      %p34 = por %p32, %p33
      %p35 = scmp.ne.s32.totalorder %s23, %s24
      %p36 = scmp.eq.s32.totalorder %s19, 3
      %p37 = por %p35, %p36
      %p39 = scmp.ne.s32.totalorder %s24, %s38
      %p40 = scmp.eq.s32.totalorder %s19, 0
      %p41 = por %p39, %p40
      %s43 = sadd.s32 %s42, 1
      %p46 = scmp.eq.s32.totalorder %s13, 3
      %p47 = scmp.ne.s32.totalorder %s42, %s44
      %p48 = scmp.eq.s32.totalorder %s13, 0
      %p49 = por %p47, %p48
      %p50 = scmp.ne.s32.totalorder %s42, %s44
      %p51 = scmp.eq.s32.totalorder %s18, 3
      %p52 = por %p50, %p51
      %p53 = scmp.ne.s32.totalorder %s44, %s45
      %p54 = scmp.eq.s32.totalorder %s18, 0
      %p55 = por %p53, %p54
      %p56 = scmp.ne.s32.totalorder %s44, %s45
      %p57 = scmp.eq.s32.totalorder %s19, 3
      %p58 = por %p56, %p57
      %p60 = scmp.ne.s32.totalorder %s45, %s59
      %p61 = scmp.eq.s32.totalorder %s19, 0
      %p62 = por %p60, %p61
      %s63 = ssub.s32 %s13, %s20
      %p64 = scmp.eq.s32.totalorder %s63, 0
      %s66 = sadd.s32 %s65, 1
      %s67 = scalar_select %p64, %s65, %s66
      %p70 = pneg %p64
      %p71 = scmp.eq.s32.totalorder %s13, 3
      %p72 = por %p70, %p71
      %p73 = scmp.ne.s32.totalorder %s65, %s68
      %p74 = scmp.eq.s32.totalorder %s13, 0
      %p75 = por %p73, %p74
      %p76 = scmp.ne.s32.totalorder %s65, %s68
      %p77 = scmp.eq.s32.totalorder %s18, 3
      %p78 = por %p76, %p77
      %p79 = scmp.ne.s32.totalorder %s68, %s69
      %p80 = scmp.eq.s32.totalorder %s18, 0
      %p81 = por %p79, %p80
      %p82 = scmp.ne.s32.totalorder %s68, %s69
      %p83 = scmp.eq.s32.totalorder %s19, 3
      %p84 = por %p82, %p83
      %p86 = scmp.ne.s32.totalorder %s69, %s85
      %p87 = scmp.eq.s32.totalorder %s19, 0
      %p88 = por %p86, %p87
      %s89 = ssub.s32 %s13, %s20
      %p90 = scmp.eq.s32.totalorder %s89, 0
      %s92 = sadd.s32 %s91, 1
      %s93 = scalar_select %p90, %s91, %s92
      %p96 = pneg %p90
      %p97 = scmp.eq.s32.totalorder %s13, 3
      %p98 = por %p96, %p97
      %p99 = scmp.ne.s32.totalorder %s91, %s94
      %p100 = scmp.eq.s32.totalorder %s13, 0
      %p101 = por %p99, %p100
      %p102 = scmp.ne.s32.totalorder %s91, %s94
      %p103 = scmp.eq.s32.totalorder %s18, 3
      %p104 = por %p102, %p103
      %p105 = scmp.ne.s32.totalorder %s94, %s95
      %p106 = scmp.eq.s32.totalorder %s18, 0
      %p107 = por %p105, %p106
      %p108 = scmp.ne.s32.totalorder %s94, %s95
      %p109 = scmp.eq.s32.totalorder %s19, 3
      %p110 = por %p108, %p109
      %p112 = scmp.ne.s32.totalorder %s95, %s111
      %p113 = scmp.eq.s32.totalorder %s19, 0
      %p114 = por %p112, %p113
      %s115 = ssub.s32 %s13, %s20
      %p116 = scmp.eq.s32.totalorder %s115, 0
      %s118 = sadd.s32 %s117, 1
      %s119 = scalar_select %p116, %s117, %s118
      %p122 = pneg %p116
      %p123 = scmp.eq.s32.totalorder %s13, 3
      %p124 = por %p122, %p123
      %p125 = scmp.ne.s32.totalorder %s117, %s120
      %p126 = scmp.eq.s32.totalorder %s13, 0
      %p127 = por %p125, %p126
      %p128 = scmp.ne.s32.totalorder %s117, %s120
      %p129 = scmp.eq.s32.totalorder %s18, 3
      %p130 = por %p128, %p129
      %p131 = scmp.ne.s32.totalorder %s120, %s121
      %p132 = scmp.eq.s32.totalorder %s18, 0
      %p133 = por %p131, %p132
      %p134 = scmp.ne.s32.totalorder %s120, %s121
      %p135 = scmp.eq.s32.totalorder %s19, 3
      %p136 = por %p134, %p135
      %p138 = scmp.ne.s32.totalorder %s121, %s137
      %p139 = scmp.eq.s32.totalorder %s19, 0
      %p140 = por %p138, %p139
      %p141 = scmp.le.s32.totalorder 1, %s13
      %p142 = scmp.lt.s32.totalorder %s13, 5
      %p143 = pnand %p141, %p142
      %p144 = pneg %p143
      // Predicated region
      $region9: #{tpu_custom_call.1} parent=5 // pred_check
        _
      $region10: #{tpu_custom_call.1} parent=5 // pred_check_branch
        %146 = sbr.rel (%p143) target = $region12
      $region11: #{tpu_custom_call.1} parent=5 // pred_region
        %s147 = ssub.s32 %s13, 1
        // Predicated region
        $region13: #{tpu_custom_call.1} parent=11 // pred_check
          %p148 = pneg %p34
        $region14: #{tpu_custom_call.1} parent=11 // pred_check_branch
          %150 = sbr.rel (%p148) target = $region16
        $region15: #{tpu_custom_call.1} parent=11 // pred_region
          _
        $region16: #{tpu_custom_call.1} parent=11 // pred_fallthru
          _
        // Predicated region
        $region17: #{tpu_custom_call.1} parent=11 // pred_check
          %p151 = pneg %p55
        $region18: #{tpu_custom_call.1} parent=11 // pred_check_branch
          %153 = sbr.rel (%p151) target = $region20
        $region19: #{tpu_custom_call.1} parent=11 // pred_region
          _
        $region20: #{tpu_custom_call.1} parent=11 // pred_fallthru
          _
      $region12: #{tpu_custom_call.1} parent=5 // pred_fallthru
        _
      %p154 = scmp.lt.s32.totalorder %s13, 4
      // Predicated region
      $region21: #{tpu_custom_call.1} parent=5 // pred_check
        %p155 = pneg %p154
      $region22: #{tpu_custom_call.1} parent=5 // pred_check_branch
        %157 = sbr.rel (%p155) target = $region24
      $region23: #{tpu_custom_call.1} parent=5 // pred_region
        // Predicated region
        $region25: #{tpu_custom_call.1} parent=23 // pred_check
          %p158 = pneg %p75
        $region26: #{tpu_custom_call.1} parent=23 // pred_check_branch
          %160 = sbr.rel (%p158) target = $region28
        $region27: #{tpu_custom_call.1} parent=23 // pred_region
          %s161 = smul.u32 8, %s13
          %p162 = scmp.lt.s32.totalorder %s161, 31
          %s163 = scalar_select %p162, %s161, 31
          %s164 = smul.addr %s163, 8
          %s165 = smul.addr %s164, 4
          %s166 = scalar_lea.vmem %s2, %s165
          %s167 = smul.u32 8, %s13
        $region28: #{tpu_custom_call.1} parent=23 // pred_fallthru
          _
        // Predicated region
        $region29: #{tpu_custom_call.1} parent=23 // pred_check
          %p168 = pneg %p101
        $region30: #{tpu_custom_call.1} parent=23 // pred_check_branch
          %170 = sbr.rel (%p168) target = $region32
        $region31: #{tpu_custom_call.1} parent=23 // pred_region
          %s171 = smul.u32 8, %s13
          %p172 = scmp.lt.s32.totalorder %s171, 31
          %s173 = scalar_select %p172, %s171, 31
          %s174 = smul.addr %s173, 2
          %s175 = smul.addr %s174, 8
          %s176 = scalar_lea.vmem %s3, %s175
          %s177 = smul.u32 8, %s13
        $region32: #{tpu_custom_call.1} parent=23 // pred_fallthru
          _
      $region24: #{tpu_custom_call.1} parent=5 // pred_fallthru
        _
      %p178 = scmp.le.s32.totalorder 1, %s13
      %p179 = scmp.lt.s32.totalorder %s13, 5
      %p180 = pnand %p178, %p179
      %p181 = pneg %p180
      // Predicated region
      $region33: #{tpu_custom_call.1} parent=5 // pred_check
        _
      $region34: #{tpu_custom_call.1} parent=5 // pred_check_branch
        %183 = sbr.rel (%p180) target = $region36
      $region35: #{tpu_custom_call.1} parent=5 // pred_region
        %s184 = ssub.s32 %s13, 1
        %p185 = pneg %p34
        %p186 = pneg %p31
        %p187 = pneg %p55
        %p188 = pneg %p52
        %s189 = smul.u32 8, %s18
        %p190 = scmp.lt.s32.totalorder %s189, 31
        %s191 = scalar_select %p190, %s189, 31
        %s192 = smul.addr %s191, 8
        %s193 = smul.addr %s192, 4
        %s194 = scalar_lea.vmem %s2, %s193
        %p195 = pneg %p81
        %p196 = pneg %p78
        %s197 = smul.u32 8, %s18
        %p198 = scmp.lt.s32.totalorder %s197, 31
        %s199 = scalar_select %p198, %s197, 31
        %s200 = smul.addr %s199, 2
        %s201 = smul.addr %s200, 8
        %s202 = scalar_lea.vmem %s3, %s201
        %p203 = pneg %p107
        %p204 = pneg %p104
        %p205 = pneg %p133
        %p206 = pneg %p130
        %s207 = sand.u32 %s120, 1
        %s208 = scalar_lea.sflag [#allocation3], %s207
        %s209 = sand.u32 %s120, 1
        %s210 = scalar_lea.vmem [#allocation2], %s209
        %s211 = smul.u32 8, %s18
        %p212 = scmp.lt.s32.totalorder %s211, 31
        %s213 = scalar_select %p212, %s211, 31
        %s214 = smul.addr %s213, 8
        %s215 = smul.addr %s214, 4
        %s216 = scalar_lea.vmem %s2, %s215
        %s217 = smul.u32 8, %s18
        %s218 = smul.u32 8, %s18
        %p219 = scmp.lt.s32.totalorder %s218, 31
        %s220 = scalar_select %p219, %s218, 31
        %s221 = smul.addr %s220, 2
        %s222 = smul.addr %s221, 8
        %s223 = scalar_lea.vmem %s3, %s222
        %s224 = smul.u32 8, %s18
        %v226 = vld [vmem:[%s0] sm:$0xff]
        %v227 = vld [vmem:[%s0 + $0x8] sm:$0xff]
        %v228 = vld [vmem:[%s0 + $0x10] sm:$0xff]
        %v229 = vld [vmem:[%s0 + $0x18] sm:$0xff]
        %v230 = vld [vmem:[%s0 + $0x20] sm:$0xff]
        %v231 = vld [vmem:[%s0 + $0x28] sm:$0xff]
        %v232 = vld [vmem:[%s0 + $0x30] sm:$0xff]
        %v233 = vld [vmem:[%s0 + $0x38] sm:$0xff]
        %v234 = vlaneseq
        %v235 = vand.u32 %v234, 127
        loop: start=0, step=1, limit=8
        $region37: #{tpu_custom_call.1} parent=35 // loop_pre_header
          _
        $region38: #{tpu_custom_call.1} parent=35 // loop_header
          %s237 = sphi 0, %s241
          %p238 = scmp.ge.s32.totalorder %s237, 8
          %v242 = vphi 0.0, %v1956
        $region39: #{tpu_custom_call.1} parent=35 // loop_header_branch
          %240 = sbr.rel (%p238) target = $region43
        $region40: #{tpu_custom_call.1} parent=35 // loop_body
          %s243 = smul.u32 %s237, 8
          %s244 = smul.addr %s243, 4
          %s245 = scalar_lea.vmem %s216, %s244
          %v246 = vld [vmem:[%s245] sm:$0xf]
          %v247 = vld [vmem:[%s245 + $0x4] sm:$0xf]
          %v248 = vld [vmem:[%s245 + $0x8] sm:$0xf]
          %v249 = vld [vmem:[%s245 + $0xc] sm:$0xf]
          %v250 = vld [vmem:[%s245 + $0x10] sm:$0xf]
          %v251 = vld [vmem:[%s245 + $0x14] sm:$0xf]
          %v252 = vld [vmem:[%s245 + $0x18] sm:$0xf]
          %v253 = vld [vmem:[%s245 + $0x1c] sm:$0xf]
          %v254 = vld [vmem:[%s1] sm:$0xf]
          %v255 = vld [vmem:[%s1 + $0x4] sm:$0xf]
          %v256 = vld [vmem:[%s1 + $0x8] sm:$0xf]
          %v257 = vld [vmem:[%s1 + $0xc] sm:$0xf]
          %v266 = vunpack.c.l.b16 %v246
          %v267 = vunpack.c.l.b16 %v247
          %v268 = vunpack.c.l.b16 %v248
          %v269 = vunpack.c.l.b16 %v249
          %v270 = vunpack.c.l.b16 %v250
          %v271 = vunpack.c.l.b16 %v251
          %v272 = vunpack.c.l.b16 %v252
          %v273 = vunpack.c.l.b16 %v253
          %v274 = vpack.c.b16 %v267, %v266
          %v275 = vpack.c.b16 %v269, %v268
          %v276 = vpack.c.b16 %v271, %v270
          %v277 = vpack.c.b16 %v273, %v272
          %v282 = vunpack.c.l.b16 %v254
          %v283 = vunpack.c.l.b16 %v255
          %v284 = vunpack.c.l.b16 %v256
          %v285 = vunpack.c.l.b16 %v257
          %v286 = vpack.c.b16 %v283, %v282
          %v287 = vpack.c.b16 %v285, %v284
          %vm290 = vcmask 261120
          %v292 = vsel %vm290, %v274, 0
          %v295 = vsel %vm290, %v275, 0
          %v298 = vsel %vm290, %v276, 0
          %v301 = vsel %vm290, %v277, 0
          %303 = vmatprep.subr.bf16.mxu0 0
          %304 = vmatpush1.bf16.msra.mxu0 %v286
          %305 = vmatprep.subr.bf16.mxu0 0
          %306 = vmatpush1.bf16.msra.mxu0 %v287
          %307 = vmatprep.subr.bf16.mxu0 0
          %308 = vmatpush1.bf16.msra.mxu0 0
          %309 = vmatprep.subr.bf16.mxu0 0
          %310 = vmatpush1.bf16.msra.mxu0 0
          %311 = vmatprep.subr.bf16.mxu0 0
          %312 = vmatpush1.bf16.msra.mxu0 0
          %313 = vmatprep.subr.bf16.mxu0 0
          %314 = vmatpush1.bf16.msra.mxu0 0
          %315 = vmatprep.subr.bf16.mxu0 0
          %316 = vmatpush1.bf16.msra.mxu0 0
          %317 = vmatprep.subr.bf16.mxu0 0
          %318 = vmatpush1.bf16.msra.mxu0 0
          %319 = vmatprep.subr.bf16.mxu0 0
          %320 = vmatpush1.bf16.msra.mxu0 0
          %321 = vmatprep.subr.bf16.mxu0 0
          %322 = vmatpush1.bf16.msra.mxu0 0
          %323 = vmatprep.subr.bf16.mxu0 0
          %324 = vmatpush1.bf16.msra.mxu0 0
          %325 = vmatprep.subr.bf16.mxu0 0
          %326 = vmatpush1.bf16.msra.mxu0 0
          %327 = vmatprep.subr.bf16.mxu0 0
          %328 = vmatpush1.bf16.msra.mxu0 0
          %329 = vmatprep.subr.bf16.mxu0 0
          %330 = vmatpush1.bf16.msra.mxu0 0
          %331 = vmatprep.subr.bf16.mxu0 0
          %332 = vmatpush1.bf16.msra.mxu0 0
          %333 = vmatprep.subr.bf16.mxu0 0
          %334 = vmatpush1.bf16.msra.mxu0 0
          %335 = vmatprep.mubr.bf16.mxu0 0
          %336 = vmatmul.mubr.bf16.gmra.mrb[0].mxu0 %v292
          %v337 = vpop.f32.mrb[0].mxu0
          %v338 = vadd.f32 0.0, %v337
          %v339 = vpop.f32.mrb[0].mxu0
          %v340 = vpop.f32.mrb[0].mxu0
          %v341 = vadd.f32 0.0, %v340
          %v342 = vpop.f32.mrb[0].mxu0
          %343 = vmatprep.mubr.bf16.mxu0 0
          %344 = vmatmul.mubr.bf16.gmra.mrb[0].mxu0 %v295
          %v345 = vpop.f32.mrb[0].mxu0
          %v346 = vadd.f32 0.0, %v345
          %v347 = vpop.f32.mrb[0].mxu0
          %v348 = vpop.f32.mrb[0].mxu0
          %v349 = vadd.f32 0.0, %v348
          %v350 = vpop.f32.mrb[0].mxu0
          %351 = vmatprep.mubr.bf16.mxu0 0
          %352 = vmatmul.mubr.bf16.gmra.mrb[0].mxu0 %v298
          %v353 = vpop.f32.mrb[0].mxu0
          %v354 = vadd.f32 0.0, %v353
          %v355 = vpop.f32.mrb[0].mxu0
          %v356 = vpop.f32.mrb[0].mxu0
          %v357 = vadd.f32 0.0, %v356
          %v358 = vpop.f32.mrb[0].mxu0
          %359 = vmatprep.mubr.bf16.mxu0 0
          %360 = vmatmul.mubr.bf16.gmra.mrb[0].mxu0 %v301
          %v361 = vpop.f32.mrb[0].mxu0
          %v362 = vadd.f32 0.0, %v361
          %v363 = vpop.f32.mrb[0].mxu0
          %v364 = vpop.f32.mrb[0].mxu0
          %v365 = vadd.f32 0.0, %v364
          %v366 = vpop.f32.mrb[0].mxu0
          %367 = vdwg.mxu0
          %s368 = smul.u32 %s237, 16
          %s369 = scalar_lea.vmem %s223, %s368
          %v370 = vld [vmem:[%s369] sm:$0x1]
          %v371 = vlaneseq
          %v372 = vshrl.u32 %v371, 7
          %v373 = vsub.s32 0, %v372
          %v374 = vrot.slane %v370, %v373
          %v375 = vsub.f32 %v338, %v374
          %v376 = vsub.f32 %v341, %v374
          %v377 = vsub.f32 %v346, %v374
          %v378 = vsub.f32 %v349, %v374
          %v379 = vsub.f32 %v354, %v374
          %v380 = vsub.f32 %v357, %v374
          %v381 = vsub.f32 %v362, %v374
          %v382 = vsub.f32 %v365, %v374
          %v383 = vand.u32 2147483647, %v375
          %v384 = vand.u32 2147483647, %v376
          %v385 = vand.u32 2147483647, %v377
          %v386 = vand.u32 2147483647, %v378
          %v387 = vand.u32 2147483647, %v379
          %v388 = vand.u32 2147483647, %v380
          %v389 = vand.u32 2147483647, %v381
          %v390 = vand.u32 2147483647, %v382
          %v391 = vadd.f32 %v383, 0.0
          %v392 = vadd.f32 %v384, 0.0
          %v393 = vadd.f32 %v385, 0.0
          %v394 = vadd.f32 %v386, 0.0
          %v395 = vadd.f32 %v387, 0.0
          %v396 = vadd.f32 %v388, 0.0
          %v397 = vadd.f32 %v389, 0.0
          %v398 = vadd.f32 %v390, 0.0
          %s399 = scalar_lea.vmem %s1, 16
          %v400 = vld [vmem:[%s399] sm:$0xf]
          %v401 = vld [vmem:[%s399 + $0x4] sm:$0xf]
          %v402 = vld [vmem:[%s399 + $0x8] sm:$0xf]
          %v403 = vld [vmem:[%s399 + $0xc] sm:$0xf]
          %v408 = vunpack.c.l.b16 %v400
          %v409 = vunpack.c.l.b16 %v401
          %v410 = vunpack.c.l.b16 %v402
          %v411 = vunpack.c.l.b16 %v403
          %v412 = vpack.c.b16 %v409, %v408
          %v413 = vpack.c.b16 %v411, %v410
          %416 = vmatprep.subr.bf16.mxu0 0
          %417 = vmatpush1.bf16.msra.mxu0 %v412
          %418 = vmatprep.subr.bf16.mxu0 0
          %419 = vmatpush1.bf16.msra.mxu0 %v413
          %420 = vmatprep.subr.bf16.mxu0 0
          %421 = vmatpush1.bf16.msra.mxu0 0
          %422 = vmatprep.subr.bf16.mxu0 0
          %423 = vmatpush1.bf16.msra.mxu0 0
          %424 = vmatprep.subr.bf16.mxu0 0
          %425 = vmatpush1.bf16.msra.mxu0 0
          %426 = vmatprep.subr.bf16.mxu0 0
          %427 = vmatpush1.bf16.msra.mxu0 0
          %428 = vmatprep.subr.bf16.mxu0 0
          %429 = vmatpush1.bf16.msra.mxu0 0
          %430 = vmatprep.subr.bf16.mxu0 0
          %431 = vmatpush1.bf16.msra.mxu0 0
          %432 = vmatprep.subr.bf16.mxu0 0
          %433 = vmatpush1.bf16.msra.mxu0 0
          %434 = vmatprep.subr.bf16.mxu0 0
          %435 = vmatpush1.bf16.msra.mxu0 0
          %436 = vmatprep.subr.bf16.mxu0 0
          %437 = vmatpush1.bf16.msra.mxu0 0
          %438 = vmatprep.subr.bf16.mxu0 0
          %439 = vmatpush1.bf16.msra.mxu0 0
          %440 = vmatprep.subr.bf16.mxu0 0
          %441 = vmatpush1.bf16.msra.mxu0 0
          %442 = vmatprep.subr.bf16.mxu0 0
          %443 = vmatpush1.bf16.msra.mxu0 0
          %444 = vmatprep.subr.bf16.mxu0 0
          %445 = vmatpush1.bf16.msra.mxu0 0
          %446 = vmatprep.subr.bf16.mxu0 0
          %447 = vmatpush1.bf16.msra.mxu0 0
          %448 = vmatprep.mubr.bf16.mxu0 0
          %449 = vmatmul.mubr.bf16.gmra.mrb[0].mxu0 %v292
          %v450 = vpop.f32.mrb[0].mxu0
          %v451 = vadd.f32 0.0, %v450
          %v452 = vpop.f32.mrb[0].mxu0
          %v453 = vpop.f32.mrb[0].mxu0
          %v454 = vadd.f32 0.0, %v453
          %v455 = vpop.f32.mrb[0].mxu0
          %456 = vmatprep.mubr.bf16.mxu0 0
          %457 = vmatmul.mubr.bf16.gmra.mrb[0].mxu0 %v295
          %v458 = vpop.f32.mrb[0].mxu0
          %v459 = vadd.f32 0.0, %v458
          %v460 = vpop.f32.mrb[0].mxu0
          %v461 = vpop.f32.mrb[0].mxu0
          %v462 = vadd.f32 0.0, %v461
          %v463 = vpop.f32.mrb[0].mxu0
          %464 = vmatprep.mubr.bf16.mxu0 0
          %465 = vmatmul.mubr.bf16.gmra.mrb[0].mxu0 %v298
          %v466 = vpop.f32.mrb[0].mxu0
          %v467 = vadd.f32 0.0, %v466
          %v468 = vpop.f32.mrb[0].mxu0
          %v469 = vpop.f32.mrb[0].mxu0
          %v470 = vadd.f32 0.0, %v469
          %v471 = vpop.f32.mrb[0].mxu0
          %472 = vmatprep.mubr.bf16.mxu0 0
          %473 = vmatmul.mubr.bf16.gmra.mrb[0].mxu0 %v301
          %v474 = vpop.f32.mrb[0].mxu0
          %v475 = vadd.f32 0.0, %v474
          %v476 = vpop.f32.mrb[0].mxu0
          %v477 = vpop.f32.mrb[0].mxu0
          %v478 = vadd.f32 0.0, %v477
          %v479 = vpop.f32.mrb[0].mxu0
          %480 = vdwg.mxu0
          %v481 = vld [vmem:[%s369 + $0x1] sm:$0x1]
          %v482 = vlaneseq
          %v483 = vshrl.u32 %v482, 7
          %v484 = vsub.s32 0, %v483
          %v485 = vrot.slane %v481, %v484
          %v486 = vsub.f32 %v451, %v485
          %v487 = vsub.f32 %v454, %v485
          %v488 = vsub.f32 %v459, %v485
          %v489 = vsub.f32 %v462, %v485
          %v490 = vsub.f32 %v467, %v485
          %v491 = vsub.f32 %v470, %v485
          %v492 = vsub.f32 %v475, %v485
          %v493 = vsub.f32 %v478, %v485
          %v494 = vand.u32 2147483647, %v486
          %v495 = vand.u32 2147483647, %v487
          %v496 = vand.u32 2147483647, %v488
          %v497 = vand.u32 2147483647, %v489
          %v498 = vand.u32 2147483647, %v490
          %v499 = vand.u32 2147483647, %v491
          %v500 = vand.u32 2147483647, %v492
          %v501 = vand.u32 2147483647, %v493
          %v502 = vadd.f32 %v391, %v494
          %v503 = vadd.f32 %v392, %v495
          %v504 = vadd.f32 %v393, %v496
          %v505 = vadd.f32 %v394, %v497
          %v506 = vadd.f32 %v395, %v498
          %v507 = vadd.f32 %v396, %v499
          %v508 = vadd.f32 %v397, %v500
          %v509 = vadd.f32 %v398, %v501
          %s510 = scalar_lea.vmem %s1, 32
          %v511 = vld [vmem:[%s510] sm:$0xf]
          %v512 = vld [vmem:[%s510 + $0x4] sm:$0xf]
          %v513 = vld [vmem:[%s510 + $0x8] sm:$0xf]
          %v514 = vld [vmem:[%s510 + $0xc] sm:$0xf]
          %v519 = vunpack.c.l.b16 %v511
          %v520 = vunpack.c.l.b16 %v512
          %v521 = vunpack.c.l.b16 %v513
          %v522 = vunpack.c.l.b16 %v514
          %v523 = vpack.c.b16 %v520, %v519
          %v524 = vpack.c.b16 %v522, %v521
          %527 = vmatprep.subr.bf16.mxu0 0
          %528 = vmatpush1.bf16.msra.mxu0 %v523
          %529 = vmatprep.subr.bf16.mxu0 0
          %530 = vmatpush1.bf16.msra.mxu0 %v524
          %531 = vmatprep.subr.bf16.mxu0 0
          %532 = vmatpush1.bf16.msra.mxu0 0
          %533 = vmatprep.subr.bf16.mxu0 0
          %534 = vmatpush1.bf16.msra.mxu0 0
          %535 = vmatprep.subr.bf16.mxu0 0
          %536 = vmatpush1.bf16.msra.mxu0 0
          %537 = vmatprep.subr.bf16.mxu0 0
          %538 = vmatpush1.bf16.msra.mxu0 0
          %539 = vmatprep.subr.bf16.mxu0 0
          %540 = vmatpush1.bf16.msra.mxu0 0
          %541 = vmatprep.subr.bf16.mxu0 0
          %542 = vmatpush1.bf16.msra.mxu0 0
          %543 = vmatprep.subr.bf16.mxu0 0
          %544 = vmatpush1.bf16.msra.mxu0 0
          %545 = vmatprep.subr.bf16.mxu0 0
          %546 = vmatpush1.bf16.msra.mxu0 0
          %547 = vmatprep.subr.bf16.mxu0 0
          %548 = vmatpush1.bf16.msra.mxu0 0
          %549 = vmatprep.subr.bf16.mxu0 0
          %550 = vmatpush1.bf16.msra.mxu0 0
          %551 = vmatprep.subr.bf16.mxu0 0
          %552 = vmatpush1.bf16.msra.mxu0 0
          %553 = vmatprep.subr.bf16.mxu0 0
          %554 = vmatpush1.bf16.msra.mxu0 0
          %555 = vmatprep.subr.bf16.mxu0 0
          %556 = vmatpush1.bf16.msra.mxu0 0
          %557 = vmatprep.subr.bf16.mxu0 0
          %558 = vmatpush1.bf16.msra.mxu0 0
          %559 = vmatprep.mubr.bf16.mxu0 0
          %560 = vmatmul.mubr.bf16.gmra.mrb[0].mxu0 %v292
          %v561 = vpop.f32.mrb[0].mxu0
          %v562 = vadd.f32 0.0, %v561
          %v563 = vpop.f32.mrb[0].mxu0
          %v564 = vpop.f32.mrb[0].mxu0
          %v565 = vadd.f32 0.0, %v564
          %v566 = vpop.f32.mrb[0].mxu0
          %567 = vmatprep.mubr.bf16.mxu0 0
          %568 = vmatmul.mubr.bf16.gmra.mrb[0].mxu0 %v295
          %v569 = vpop.f32.mrb[0].mxu0
          %v570 = vadd.f32 0.0, %v569
          %v571 = vpop.f32.mrb[0].mxu0
          %v572 = vpop.f32.mrb[0].mxu0
          %v573 = vadd.f32 0.0, %v572
          %v574 = vpop.f32.mrb[0].mxu0
          %575 = vmatprep.mubr.bf16.mxu0 0
          %576 = vmatmul.mubr.bf16.gmra.mrb[0].mxu0 %v298
          %v577 = vpop.f32.mrb[0].mxu0
          %v578 = vadd.f32 0.0, %v577
          %v579 = vpop.f32.mrb[0].mxu0
          %v580 = vpop.f32.mrb[0].mxu0
          %v581 = vadd.f32 0.0, %v580
          %v582 = vpop.f32.mrb[0].mxu0
          %583 = vmatprep.mubr.bf16.mxu0 0
          %584 = vmatmul.mubr.bf16.gmra.mrb[0].mxu0 %v301
          %v585 = vpop.f32.mrb[0].mxu0
          %v586 = vadd.f32 0.0, %v585
          %v587 = vpop.f32.mrb[0].mxu0
          %v588 = vpop.f32.mrb[0].mxu0
          %v589 = vadd.f32 0.0, %v588
          %v590 = vpop.f32.mrb[0].mxu0
          %591 = vdwg.mxu0
          %v592 = vld [vmem:[%s369 + $0x2] sm:$0x1]
          %v593 = vlaneseq
          %v594 = vshrl.u32 %v593, 7
          %v595 = vsub.s32 0, %v594
          %v596 = vrot.slane %v592, %v595
          %v597 = vsub.f32 %v562, %v596
          %v598 = vsub.f32 %v565, %v596
          %v599 = vsub.f32 %v570, %v596
          %v600 = vsub.f32 %v573, %v596
          %v601 = vsub.f32 %v578, %v596
          %v602 = vsub.f32 %v581, %v596
          %v603 = vsub.f32 %v586, %v596
          %v604 = vsub.f32 %v589, %v596
          %v605 = vand.u32 2147483647, %v597
          %v606 = vand.u32 2147483647, %v598
          %v607 = vand.u32 2147483647, %v599
          %v608 = vand.u32 2147483647, %v600
          %v609 = vand.u32 2147483647, %v601
          %v610 = vand.u32 2147483647, %v602
          %v611 = vand.u32 2147483647, %v603
          %v612 = vand.u32 2147483647, %v604
          %v613 = vadd.f32 %v502, %v605
          %v614 = vadd.f32 %v503, %v606
          %v615 = vadd.f32 %v504, %v607
          %v616 = vadd.f32 %v505, %v608
          %v617 = vadd.f32 %v506, %v609
          %v618 = vadd.f32 %v507, %v610
          %v619 = vadd.f32 %v508, %v611
          %v620 = vadd.f32 %v509, %v612
          %s621 = scalar_lea.vmem %s1, 48
          %v622 = vld [vmem:[%s621] sm:$0xf]
          %v623 = vld [vmem:[%s621 + $0x4] sm:$0xf]
          %v624 = vld [vmem:[%s621 + $0x8] sm:$0xf]
          %v625 = vld [vmem:[%s621 + $0xc] sm:$0xf]
          %v630 = vunpack.c.l.b16 %v622
          %v631 = vunpack.c.l.b16 %v623
          %v632 = vunpack.c.l.b16 %v624
          %v633 = vunpack.c.l.b16 %v625
          %v634 = vpack.c.b16 %v631, %v630
          %v635 = vpack.c.b16 %v633, %v632
          %638 = vmatprep.subr.bf16.mxu0 0
          %639 = vmatpush1.bf16.msra.mxu0 %v634
          %640 = vmatprep.subr.bf16.mxu0 0
          %641 = vmatpush1.bf16.msra.mxu0 %v635
          %642 = vmatprep.subr.bf16.mxu0 0
          %643 = vmatpush1.bf16.msra.mxu0 0
          %644 = vmatprep.subr.bf16.mxu0 0
          %645 = vmatpush1.bf16.msra.mxu0 0
          %646 = vmatprep.subr.bf16.mxu0 0
          %647 = vmatpush1.bf16.msra.mxu0 0
          %648 = vmatprep.subr.bf16.mxu0 0
          %649 = vmatpush1.bf16.msra.mxu0 0
          %650 = vmatprep.subr.bf16.mxu0 0
          %651 = vmatpush1.bf16.msra.mxu0 0
          %652 = vmatprep.subr.bf16.mxu0 0
          %653 = vmatpush1.bf16.msra.mxu0 0
          %654 = vmatprep.subr.bf16.mxu0 0
          %655 = vmatpush1.bf16.msra.mxu0 0
          %656 = vmatprep.subr.bf16.mxu0 0
          %657 = vmatpush1.bf16.msra.mxu0 0
          %658 = vmatprep.subr.bf16.mxu0 0
          %659 = vmatpush1.bf16.msra.mxu0 0
          %660 = vmatprep.subr.bf16.mxu0 0
          %661 = vmatpush1.bf16.msra.mxu0 0
          %662 = vmatprep.subr.bf16.mxu0 0
          %663 = vmatpush1.bf16.msra.mxu0 0
          %664 = vmatprep.subr.bf16.mxu0 0
          %665 = vmatpush1.bf16.msra.mxu0 0
          %666 = vmatprep.subr.bf16.mxu0 0
          %667 = vmatpush1.bf16.msra.mxu0 0
          %668 = vmatprep.subr.bf16.mxu0 0
          %669 = vmatpush1.bf16.msra.mxu0 0
          %670 = vmatprep.mubr.bf16.mxu0 0
          %671 = vmatmul.mubr.bf16.gmra.mrb[0].mxu0 %v292
          %v672 = vpop.f32.mrb[0].mxu0
          %v673 = vadd.f32 0.0, %v672
          %v674 = vpop.f32.mrb[0].mxu0
          %v675 = vpop.f32.mrb[0].mxu0
          %v676 = vadd.f32 0.0, %v675
          %v677 = vpop.f32.mrb[0].mxu0
          %678 = vmatprep.mubr.bf16.mxu0 0
          %679 = vmatmul.mubr.bf16.gmra.mrb[0].mxu0 %v295
          %v680 = vpop.f32.mrb[0].mxu0
          %v681 = vadd.f32 0.0, %v680
          %v682 = vpop.f32.mrb[0].mxu0
          %v683 = vpop.f32.mrb[0].mxu0
          %v684 = vadd.f32 0.0, %v683
          %v685 = vpop.f32.mrb[0].mxu0
          %686 = vmatprep.mubr.bf16.mxu0 0
          %687 = vmatmul.mubr.bf16.gmra.mrb[0].mxu0 %v298
          %v688 = vpop.f32.mrb[0].mxu0
          %v689 = vadd.f32 0.0, %v688
          %v690 = vpop.f32.mrb[0].mxu0
          %v691 = vpop.f32.mrb[0].mxu0
          %v692 = vadd.f32 0.0, %v691
          %v693 = vpop.f32.mrb[0].mxu0
          %694 = vmatprep.mubr.bf16.mxu0 0
          %695 = vmatmul.mubr.bf16.gmra.mrb[0].mxu0 %v301
          %v696 = vpop.f32.mrb[0].mxu0
          %v697 = vadd.f32 0.0, %v696
          %v698 = vpop.f32.mrb[0].mxu0
          %v699 = vpop.f32.mrb[0].mxu0
          %v700 = vadd.f32 0.0, %v699
          %v701 = vpop.f32.mrb[0].mxu0
          %702 = vdwg.mxu0
          %v703 = vld [vmem:[%s369 + $0x3] sm:$0x1]
          %v704 = vlaneseq
          %v705 = vshrl.u32 %v704, 7
          %v706 = vsub.s32 0, %v705
          %v707 = vrot.slane %v703, %v706
          %v708 = vsub.f32 %v673, %v707
          %v709 = vsub.f32 %v676, %v707
          %v710 = vsub.f32 %v681, %v707
          %v711 = vsub.f32 %v684, %v707
          %v712 = vsub.f32 %v689, %v707
          %v713 = vsub.f32 %v692, %v707
          %v714 = vsub.f32 %v697, %v707
          %v715 = vsub.f32 %v700, %v707
          %v716 = vand.u32 2147483647, %v708
          %v717 = vand.u32 2147483647, %v709
          %v718 = vand.u32 2147483647, %v710
          %v719 = vand.u32 2147483647, %v711
          %v720 = vand.u32 2147483647, %v712
          %v721 = vand.u32 2147483647, %v713
          %v722 = vand.u32 2147483647, %v714
          %v723 = vand.u32 2147483647, %v715
          %v724 = vadd.f32 %v613, %v716
          %v725 = vadd.f32 %v614, %v717
          %v726 = vadd.f32 %v615, %v718
          %v727 = vadd.f32 %v616, %v719
          %v728 = vadd.f32 %v617, %v720
          %v729 = vadd.f32 %v618, %v721
          %v730 = vadd.f32 %v619, %v722
          %v731 = vadd.f32 %v620, %v723
          %s732 = scalar_lea.vmem %s1, 64
          %v733 = vld [vmem:[%s732] sm:$0xf]
          %v734 = vld [vmem:[%s732 + $0x4] sm:$0xf]
          %v735 = vld [vmem:[%s732 + $0x8] sm:$0xf]
          %v736 = vld [vmem:[%s732 + $0xc] sm:$0xf]
          %v741 = vunpack.c.l.b16 %v733
          %v742 = vunpack.c.l.b16 %v734
          %v743 = vunpack.c.l.b16 %v735
          %v744 = vunpack.c.l.b16 %v736
          %v745 = vpack.c.b16 %v742, %v741
          %v746 = vpack.c.b16 %v744, %v743
          %749 = vmatprep.subr.bf16.mxu0 0
          %750 = vmatpush1.bf16.msra.mxu0 %v745
          %751 = vmatprep.subr.bf16.mxu0 0
          %752 = vmatpush1.bf16.msra.mxu0 %v746
          %753 = vmatprep.subr.bf16.mxu0 0
          %754 = vmatpush1.bf16.msra.mxu0 0
          %755 = vmatprep.subr.bf16.mxu0 0
          %756 = vmatpush1.bf16.msra.mxu0 0
          %757 = vmatprep.subr.bf16.mxu0 0
          %758 = vmatpush1.bf16.msra.mxu0 0
          %759 = vmatprep.subr.bf16.mxu0 0
          %760 = vmatpush1.bf16.msra.mxu0 0
          %761 = vmatprep.subr.bf16.mxu0 0
          %762 = vmatpush1.bf16.msra.mxu0 0
          %763 = vmatprep.subr.bf16.mxu0 0
          %764 = vmatpush1.bf16.msra.mxu0 0
          %765 = vmatprep.subr.bf16.mxu0 0
          %766 = vmatpush1.bf16.msra.mxu0 0
          %767 = vmatprep.subr.bf16.mxu0 0
          %768 = vmatpush1.bf16.msra.mxu0 0
          %769 = vmatprep.subr.bf16.mxu0 0
          %770 = vmatpush1.bf16.msra.mxu0 0
          %771 = vmatprep.subr.bf16.mxu0 0
          %772 = vmatpush1.bf16.msra.mxu0 0
          %773 = vmatprep.subr.bf16.mxu0 0
          %774 = vmatpush1.bf16.msra.mxu0 0
          %775 = vmatprep.subr.bf16.mxu0 0
          %776 = vmatpush1.bf16.msra.mxu0 0
          %777 = vmatprep.subr.bf16.mxu0 0
          %778 = vmatpush1.bf16.msra.mxu0 0
          %779 = vmatprep.subr.bf16.mxu0 0
          %780 = vmatpush1.bf16.msra.mxu0 0
          %781 = vmatprep.mubr.bf16.mxu0 0
          %782 = vmatmul.mubr.bf16.gmra.mrb[0].mxu0 %v292
          %v783 = vpop.f32.mrb[0].mxu0
          %v784 = vadd.f32 0.0, %v783
          %v785 = vpop.f32.mrb[0].mxu0
          %v786 = vpop.f32.mrb[0].mxu0
          %v787 = vadd.f32 0.0, %v786
          %v788 = vpop.f32.mrb[0].mxu0
          %789 = vmatprep.mubr.bf16.mxu0 0
          %790 = vmatmul.mubr.bf16.gmra.mrb[0].mxu0 %v295
          %v791 = vpop.f32.mrb[0].mxu0
          %v792 = vadd.f32 0.0, %v791
          %v793 = vpop.f32.mrb[0].mxu0
          %v794 = vpop.f32.mrb[0].mxu0
          %v795 = vadd.f32 0.0, %v794
          %v796 = vpop.f32.mrb[0].mxu0
          %797 = vmatprep.mubr.bf16.mxu0 0
          %798 = vmatmul.mubr.bf16.gmra.mrb[0].mxu0 %v298
          %v799 = vpop.f32.mrb[0].mxu0
          %v800 = vadd.f32 0.0, %v799
          %v801 = vpop.f32.mrb[0].mxu0
          %v802 = vpop.f32.mrb[0].mxu0
          %v803 = vadd.f32 0.0, %v802
          %v804 = vpop.f32.mrb[0].mxu0
          %805 = vmatprep.mubr.bf16.mxu0 0
          %806 = vmatmul.mubr.bf16.gmra.mrb[0].mxu0 %v301
          %v807 = vpop.f32.mrb[0].mxu0
          %v808 = vadd.f32 0.0, %v807
          %v809 = vpop.f32.mrb[0].mxu0
          %v810 = vpop.f32.mrb[0].mxu0
          %v811 = vadd.f32 0.0, %v810
          %v812 = vpop.f32.mrb[0].mxu0
          %813 = vdwg.mxu0
          %v814 = vld [vmem:[%s369 + $0x4] sm:$0x1]
          %v815 = vlaneseq
          %v816 = vshrl.u32 %v815, 7
          %v817 = vsub.s32 0, %v816
          %v818 = vrot.slane %v814, %v817
          %v819 = vsub.f32 %v784, %v818
          %v820 = vsub.f32 %v787, %v818
          %v821 = vsub.f32 %v792, %v818
          %v822 = vsub.f32 %v795, %v818
          %v823 = vsub.f32 %v800, %v818
          %v824 = vsub.f32 %v803, %v818
          %v825 = vsub.f32 %v808, %v818
          %v826 = vsub.f32 %v811, %v818
          %v827 = vand.u32 2147483647, %v819
          %v828 = vand.u32 2147483647, %v820
          %v829 = vand.u32 2147483647, %v821
          %v830 = vand.u32 2147483647, %v822
          %v831 = vand.u32 2147483647, %v823
          %v832 = vand.u32 2147483647, %v824
          %v833 = vand.u32 2147483647, %v825
          %v834 = vand.u32 2147483647, %v826
          %v835 = vadd.f32 %v724, %v827
          %v836 = vadd.f32 %v725, %v828
          %v837 = vadd.f32 %v726, %v829
          %v838 = vadd.f32 %v727, %v830
          %v839 = vadd.f32 %v728, %v831
          %v840 = vadd.f32 %v729, %v832
          %v841 = vadd.f32 %v730, %v833
          %v842 = vadd.f32 %v731, %v834
          %s843 = scalar_lea.vmem %s1, 80
          %v844 = vld [vmem:[%s843] sm:$0xf]
          %v845 = vld [vmem:[%s843 + $0x4] sm:$0xf]
          %v846 = vld [vmem:[%s843 + $0x8] sm:$0xf]
          %v847 = vld [vmem:[%s843 + $0xc] sm:$0xf]
          %v852 = vunpack.c.l.b16 %v844
          %v853 = vunpack.c.l.b16 %v845
          %v854 = vunpack.c.l.b16 %v846
          %v855 = vunpack.c.l.b16 %v847
          %v856 = vpack.c.b16 %v853, %v852
          %v857 = vpack.c.b16 %v855, %v854
          %860 = vmatprep.subr.bf16.mxu0 0
          %861 = vmatpush1.bf16.msra.mxu0 %v856
          %862 = vmatprep.subr.bf16.mxu0 0
          %863 = vmatpush1.bf16.msra.mxu0 %v857
          %864 = vmatprep.subr.bf16.mxu0 0
          %865 = vmatpush1.bf16.msra.mxu0 0
          %866 = vmatprep.subr.bf16.mxu0 0
          %867 = vmatpush1.bf16.msra.mxu0 0
          %868 = vmatprep.subr.bf16.mxu0 0
          %869 = vmatpush1.bf16.msra.mxu0 0
          %870 = vmatprep.subr.bf16.mxu0 0
          %871 = vmatpush1.bf16.msra.mxu0 0
          %872 = vmatprep.subr.bf16.mxu0 0
          %873 = vmatpush1.bf16.msra.mxu0 0
          %874 = vmatprep.subr.bf16.mxu0 0
          %875 = vmatpush1.bf16.msra.mxu0 0
          %876 = vmatprep.subr.bf16.mxu0 0
          %877 = vmatpush1.bf16.msra.mxu0 0
          %878 = vmatprep.subr.bf16.mxu0 0
          %879 = vmatpush1.bf16.msra.mxu0 0
          %880 = vmatprep.subr.bf16.mxu0 0
          %881 = vmatpush1.bf16.msra.mxu0 0
          %882 = vmatprep.subr.bf16.mxu0 0
          %883 = vmatpush1.bf16.msra.mxu0 0
          %884 = vmatprep.subr.bf16.mxu0 0
          %885 = vmatpush1.bf16.msra.mxu0 0
          %886 = vmatprep.subr.bf16.mxu0 0
          %887 = vmatpush1.bf16.msra.mxu0 0
          %888 = vmatprep.subr.bf16.mxu0 0
          %889 = vmatpush1.bf16.msra.mxu0 0
          %890 = vmatprep.subr.bf16.mxu0 0
          %891 = vmatpush1.bf16.msra.mxu0 0
          %892 = vmatprep.mubr.bf16.mxu0 0
          %893 = vmatmul.mubr.bf16.gmra.mrb[0].mxu0 %v292
          %v894 = vpop.f32.mrb[0].mxu0
          %v895 = vadd.f32 0.0, %v894
          %v896 = vpop.f32.mrb[0].mxu0
          %v897 = vpop.f32.mrb[0].mxu0
          %v898 = vadd.f32 0.0, %v897
          %v899 = vpop.f32.mrb[0].mxu0
          %900 = vmatprep.mubr.bf16.mxu0 0
          %901 = vmatmul.mubr.bf16.gmra.mrb[0].mxu0 %v295
          %v902 = vpop.f32.mrb[0].mxu0
          %v903 = vadd.f32 0.0, %v902
          %v904 = vpop.f32.mrb[0].mxu0
          %v905 = vpop.f32.mrb[0].mxu0
          %v906 = vadd.f32 0.0, %v905
          %v907 = vpop.f32.mrb[0].mxu0
          %908 = vmatprep.mubr.bf16.mxu0 0
          %909 = vmatmul.mubr.bf16.gmra.mrb[0].mxu0 %v298
          %v910 = vpop.f32.mrb[0].mxu0
          %v911 = vadd.f32 0.0, %v910
          %v912 = vpop.f32.mrb[0].mxu0
          %v913 = vpop.f32.mrb[0].mxu0
          %v914 = vadd.f32 0.0, %v913
          %v915 = vpop.f32.mrb[0].mxu0
          %916 = vmatprep.mubr.bf16.mxu0 0
          %917 = vmatmul.mubr.bf16.gmra.mrb[0].mxu0 %v301
          %v918 = vpop.f32.mrb[0].mxu0
          %v919 = vadd.f32 0.0, %v918
          %v920 = vpop.f32.mrb[0].mxu0
          %v921 = vpop.f32.mrb[0].mxu0
          %v922 = vadd.f32 0.0, %v921
          %v923 = vpop.f32.mrb[0].mxu0
          %924 = vdwg.mxu0
          %v925 = vld [vmem:[%s369 + $0x5] sm:$0x1]
          %v926 = vlaneseq
          %v927 = vshrl.u32 %v926, 7
          %v928 = vsub.s32 0, %v927
          %v929 = vrot.slane %v925, %v928
          %v930 = vsub.f32 %v895, %v929
          %v931 = vsub.f32 %v898, %v929
          %v932 = vsub.f32 %v903, %v929
          %v933 = vsub.f32 %v906, %v929
          %v934 = vsub.f32 %v911, %v929
          %v935 = vsub.f32 %v914, %v929
          %v936 = vsub.f32 %v919, %v929
          %v937 = vsub.f32 %v922, %v929
          %v938 = vand.u32 2147483647, %v930
          %v939 = vand.u32 2147483647, %v931
          %v940 = vand.u32 2147483647, %v932
          %v941 = vand.u32 2147483647, %v933
          %v942 = vand.u32 2147483647, %v934
          %v943 = vand.u32 2147483647, %v935
          %v944 = vand.u32 2147483647, %v936
          %v945 = vand.u32 2147483647, %v937
          %v946 = vadd.f32 %v835, %v938
          %v947 = vadd.f32 %v836, %v939
          %v948 = vadd.f32 %v837, %v940
          %v949 = vadd.f32 %v838, %v941
          %v950 = vadd.f32 %v839, %v942
          %v951 = vadd.f32 %v840, %v943
          %v952 = vadd.f32 %v841, %v944
          %v953 = vadd.f32 %v842, %v945
          %s954 = scalar_lea.vmem %s1, 96
          %v955 = vld [vmem:[%s954] sm:$0xf]
          %v956 = vld [vmem:[%s954 + $0x4] sm:$0xf]
          %v957 = vld [vmem:[%s954 + $0x8] sm:$0xf]
          %v958 = vld [vmem:[%s954 + $0xc] sm:$0xf]
          %v963 = vunpack.c.l.b16 %v955
          %v964 = vunpack.c.l.b16 %v956
          %v965 = vunpack.c.l.b16 %v957
          %v966 = vunpack.c.l.b16 %v958
          %v967 = vpack.c.b16 %v964, %v963
          %v968 = vpack.c.b16 %v966, %v965
          %971 = vmatprep.subr.bf16.mxu0 0
          %972 = vmatpush1.bf16.msra.mxu0 %v967
          %973 = vmatprep.subr.bf16.mxu0 0
          %974 = vmatpush1.bf16.msra.mxu0 %v968
          %975 = vmatprep.subr.bf16.mxu0 0
          %976 = vmatpush1.bf16.msra.mxu0 0
          %977 = vmatprep.subr.bf16.mxu0 0
          %978 = vmatpush1.bf16.msra.mxu0 0
          %979 = vmatprep.subr.bf16.mxu0 0
          %980 = vmatpush1.bf16.msra.mxu0 0
          %981 = vmatprep.subr.bf16.mxu0 0
          %982 = vmatpush1.bf16.msra.mxu0 0
          %983 = vmatprep.subr.bf16.mxu0 0
          %984 = vmatpush1.bf16.msra.mxu0 0
          %985 = vmatprep.subr.bf16.mxu0 0
          %986 = vmatpush1.bf16.msra.mxu0 0
          %987 = vmatprep.subr.bf16.mxu0 0
          %988 = vmatpush1.bf16.msra.mxu0 0
          %989 = vmatprep.subr.bf16.mxu0 0
          %990 = vmatpush1.bf16.msra.mxu0 0
          %991 = vmatprep.subr.bf16.mxu0 0
          %992 = vmatpush1.bf16.msra.mxu0 0
          %993 = vmatprep.subr.bf16.mxu0 0
          %994 = vmatpush1.bf16.msra.mxu0 0
          %995 = vmatprep.subr.bf16.mxu0 0
          %996 = vmatpush1.bf16.msra.mxu0 0
          %997 = vmatprep.subr.bf16.mxu0 0
          %998 = vmatpush1.bf16.msra.mxu0 0
          %999 = vmatprep.subr.bf16.mxu0 0
          %1000 = vmatpush1.bf16.msra.mxu0 0
          %1001 = vmatprep.subr.bf16.mxu0 0
          %1002 = vmatpush1.bf16.msra.mxu0 0
          %1003 = vmatprep.mubr.bf16.mxu0 0
          %1004 = vmatmul.mubr.bf16.gmra.mrb[0].mxu0 %v292
          %v1005 = vpop.f32.mrb[0].mxu0
          %v1006 = vadd.f32 0.0, %v1005
          %v1007 = vpop.f32.mrb[0].mxu0
          %v1008 = vpop.f32.mrb[0].mxu0
          %v1009 = vadd.f32 0.0, %v1008
          %v1010 = vpop.f32.mrb[0].mxu0
          %1011 = vmatprep.mubr.bf16.mxu0 0
          %1012 = vmatmul.mubr.bf16.gmra.mrb[0].mxu0 %v295
          %v1013 = vpop.f32.mrb[0].mxu0
          %v1014 = vadd.f32 0.0, %v1013
          %v1015 = vpop.f32.mrb[0].mxu0
          %v1016 = vpop.f32.mrb[0].mxu0
          %v1017 = vadd.f32 0.0, %v1016
          %v1018 = vpop.f32.mrb[0].mxu0
          %1019 = vmatprep.mubr.bf16.mxu0 0
          %1020 = vmatmul.mubr.bf16.gmra.mrb[0].mxu0 %v298
          %v1021 = vpop.f32.mrb[0].mxu0
          %v1022 = vadd.f32 0.0, %v1021
          %v1023 = vpop.f32.mrb[0].mxu0
          %v1024 = vpop.f32.mrb[0].mxu0
          %v1025 = vadd.f32 0.0, %v1024
          %v1026 = vpop.f32.mrb[0].mxu0
          %1027 = vmatprep.mubr.bf16.mxu0 0
          %1028 = vmatmul.mubr.bf16.gmra.mrb[0].mxu0 %v301
          %v1029 = vpop.f32.mrb[0].mxu0
          %v1030 = vadd.f32 0.0, %v1029
          %v1031 = vpop.f32.mrb[0].mxu0
          %v1032 = vpop.f32.mrb[0].mxu0
          %v1033 = vadd.f32 0.0, %v1032
          %v1034 = vpop.f32.mrb[0].mxu0
          %1035 = vdwg.mxu0
          %v1036 = vld [vmem:[%s369 + $0x6] sm:$0x1]
          %v1037 = vlaneseq
          %v1038 = vshrl.u32 %v1037, 7
          %v1039 = vsub.s32 0, %v1038
          %v1040 = vrot.slane %v1036, %v1039
          %v1041 = vsub.f32 %v1006, %v1040
          %v1042 = vsub.f32 %v1009, %v1040
          %v1043 = vsub.f32 %v1014, %v1040
          %v1044 = vsub.f32 %v1017, %v1040
          %v1045 = vsub.f32 %v1022, %v1040
          %v1046 = vsub.f32 %v1025, %v1040
          %v1047 = vsub.f32 %v1030, %v1040
          %v1048 = vsub.f32 %v1033, %v1040
          %v1049 = vand.u32 2147483647, %v1041
          %v1050 = vand.u32 2147483647, %v1042
          %v1051 = vand.u32 2147483647, %v1043
          %v1052 = vand.u32 2147483647, %v1044
          %v1053 = vand.u32 2147483647, %v1045
          %v1054 = vand.u32 2147483647, %v1046
          %v1055 = vand.u32 2147483647, %v1047
          %v1056 = vand.u32 2147483647, %v1048
          %v1057 = vadd.f32 %v946, %v1049
          %v1058 = vadd.f32 %v947, %v1050
          %v1059 = vadd.f32 %v948, %v1051
          %v1060 = vadd.f32 %v949, %v1052
          %v1061 = vadd.f32 %v950, %v1053
          %v1062 = vadd.f32 %v951, %v1054
          %v1063 = vadd.f32 %v952, %v1055
          %v1064 = vadd.f32 %v953, %v1056
          %s1065 = scalar_lea.vmem %s1, 112
          %v1066 = vld [vmem:[%s1065] sm:$0xf]
          %v1067 = vld [vmem:[%s1065 + $0x4] sm:$0xf]
          %v1068 = vld [vmem:[%s1065 + $0x8] sm:$0xf]
          %v1069 = vld [vmem:[%s1065 + $0xc] sm:$0xf]
          %v1074 = vunpack.c.l.b16 %v1066
          %v1075 = vunpack.c.l.b16 %v1067
          %v1076 = vunpack.c.l.b16 %v1068
          %v1077 = vunpack.c.l.b16 %v1069
          %v1078 = vpack.c.b16 %v1075, %v1074
          %v1079 = vpack.c.b16 %v1077, %v1076
          %1082 = vmatprep.subr.bf16.mxu0 0
          %1083 = vmatpush1.bf16.msra.mxu0 %v1078
          %1084 = vmatprep.subr.bf16.mxu0 0
          %1085 = vmatpush1.bf16.msra.mxu0 %v1079
          %1086 = vmatprep.subr.bf16.mxu0 0
          %1087 = vmatpush1.bf16.msra.mxu0 0
          %1088 = vmatprep.subr.bf16.mxu0 0
          %1089 = vmatpush1.bf16.msra.mxu0 0
          %1090 = vmatprep.subr.bf16.mxu0 0
          %1091 = vmatpush1.bf16.msra.mxu0 0
          %1092 = vmatprep.subr.bf16.mxu0 0
          %1093 = vmatpush1.bf16.msra.mxu0 0
          %1094 = vmatprep.subr.bf16.mxu0 0
          %1095 = vmatpush1.bf16.msra.mxu0 0
          %1096 = vmatprep.subr.bf16.mxu0 0
          %1097 = vmatpush1.bf16.msra.mxu0 0
          %1098 = vmatprep.subr.bf16.mxu0 0
          %1099 = vmatpush1.bf16.msra.mxu0 0
          %1100 = vmatprep.subr.bf16.mxu0 0
          %1101 = vmatpush1.bf16.msra.mxu0 0
          %1102 = vmatprep.subr.bf16.mxu0 0
          %1103 = vmatpush1.bf16.msra.mxu0 0
          %1104 = vmatprep.subr.bf16.mxu0 0
          %1105 = vmatpush1.bf16.msra.mxu0 0
          %1106 = vmatprep.subr.bf16.mxu0 0
          %1107 = vmatpush1.bf16.msra.mxu0 0
          %1108 = vmatprep.subr.bf16.mxu0 0
          %1109 = vmatpush1.bf16.msra.mxu0 0
          %1110 = vmatprep.subr.bf16.mxu0 0
          %1111 = vmatpush1.bf16.msra.mxu0 0
          %1112 = vmatprep.subr.bf16.mxu0 0
          %1113 = vmatpush1.bf16.msra.mxu0 0
          %1114 = vmatprep.mubr.bf16.mxu0 0
          %1115 = vmatmul.mubr.bf16.gmra.mrb[0].mxu0 %v292
          %v1116 = vpop.f32.mrb[0].mxu0
          %v1117 = vadd.f32 0.0, %v1116
          %v1118 = vpop.f32.mrb[0].mxu0
          %v1119 = vpop.f32.mrb[0].mxu0
          %v1120 = vadd.f32 0.0, %v1119
          %v1121 = vpop.f32.mrb[0].mxu0
          %1122 = vmatprep.mubr.bf16.mxu0 0
          %1123 = vmatmul.mubr.bf16.gmra.mrb[0].mxu0 %v295
          %v1124 = vpop.f32.mrb[0].mxu0
          %v1125 = vadd.f32 0.0, %v1124
          %v1126 = vpop.f32.mrb[0].mxu0
          %v1127 = vpop.f32.mrb[0].mxu0
          %v1128 = vadd.f32 0.0, %v1127
          %v1129 = vpop.f32.mrb[0].mxu0
          %1130 = vmatprep.mubr.bf16.mxu0 0
          %1131 = vmatmul.mubr.bf16.gmra.mrb[0].mxu0 %v298
          %v1132 = vpop.f32.mrb[0].mxu0
          %v1133 = vadd.f32 0.0, %v1132
          %v1134 = vpop.f32.mrb[0].mxu0
          %v1135 = vpop.f32.mrb[0].mxu0
          %v1136 = vadd.f32 0.0, %v1135
          %v1137 = vpop.f32.mrb[0].mxu0
          %1138 = vmatprep.mubr.bf16.mxu0 0
          %1139 = vmatmul.mubr.bf16.gmra.mrb[0].mxu0 %v301
          %v1140 = vpop.f32.mrb[0].mxu0
          %v1141 = vadd.f32 0.0, %v1140
          %v1142 = vpop.f32.mrb[0].mxu0
          %v1143 = vpop.f32.mrb[0].mxu0
          %v1144 = vadd.f32 0.0, %v1143
          %v1145 = vpop.f32.mrb[0].mxu0
          %1146 = vdwg.mxu0
          %v1147 = vld [vmem:[%s369 + $0x7] sm:$0x1]
          %v1148 = vlaneseq
          %v1149 = vshrl.u32 %v1148, 7
          %v1150 = vsub.s32 0, %v1149
          %v1151 = vrot.slane %v1147, %v1150
          %v1152 = vsub.f32 %v1117, %v1151
          %v1153 = vsub.f32 %v1120, %v1151
          %v1154 = vsub.f32 %v1125, %v1151
          %v1155 = vsub.f32 %v1128, %v1151
          %v1156 = vsub.f32 %v1133, %v1151
          %v1157 = vsub.f32 %v1136, %v1151
          %v1158 = vsub.f32 %v1141, %v1151
          %v1159 = vsub.f32 %v1144, %v1151
          %v1160 = vand.u32 2147483647, %v1152
          %v1161 = vand.u32 2147483647, %v1153
          %v1162 = vand.u32 2147483647, %v1154
          %v1163 = vand.u32 2147483647, %v1155
          %v1164 = vand.u32 2147483647, %v1156
          %v1165 = vand.u32 2147483647, %v1157
          %v1166 = vand.u32 2147483647, %v1158
          %v1167 = vand.u32 2147483647, %v1159
          %v1168 = vadd.f32 %v1057, %v1160
          %v1169 = vadd.f32 %v1058, %v1161
          %v1170 = vadd.f32 %v1059, %v1162
          %v1171 = vadd.f32 %v1060, %v1163
          %v1172 = vadd.f32 %v1061, %v1164
          %v1173 = vadd.f32 %v1062, %v1165
          %v1174 = vadd.f32 %v1063, %v1166
          %v1175 = vadd.f32 %v1064, %v1167
          %s1176 = scalar_lea.vmem %s1, 128
          %v1177 = vld [vmem:[%s1176] sm:$0xf]
          %v1178 = vld [vmem:[%s1176 + $0x4] sm:$0xf]
          %v1179 = vld [vmem:[%s1176 + $0x8] sm:$0xf]
          %v1180 = vld [vmem:[%s1176 + $0xc] sm:$0xf]
          %v1185 = vunpack.c.l.b16 %v1177
          %v1186 = vunpack.c.l.b16 %v1178
          %v1187 = vunpack.c.l.b16 %v1179
          %v1188 = vunpack.c.l.b16 %v1180
          %v1189 = vpack.c.b16 %v1186, %v1185
          %v1190 = vpack.c.b16 %v1188, %v1187
          %1193 = vmatprep.subr.bf16.mxu0 0
          %1194 = vmatpush1.bf16.msra.mxu0 %v1189
          %1195 = vmatprep.subr.bf16.mxu0 0
          %1196 = vmatpush1.bf16.msra.mxu0 %v1190
          %1197 = vmatprep.subr.bf16.mxu0 0
          %1198 = vmatpush1.bf16.msra.mxu0 0
          %1199 = vmatprep.subr.bf16.mxu0 0
          %1200 = vmatpush1.bf16.msra.mxu0 0
          %1201 = vmatprep.subr.bf16.mxu0 0
          %1202 = vmatpush1.bf16.msra.mxu0 0
          %1203 = vmatprep.subr.bf16.mxu0 0
          %1204 = vmatpush1.bf16.msra.mxu0 0
          %1205 = vmatprep.subr.bf16.mxu0 0
          %1206 = vmatpush1.bf16.msra.mxu0 0
          %1207 = vmatprep.subr.bf16.mxu0 0
          %1208 = vmatpush1.bf16.msra.mxu0 0
          %1209 = vmatprep.subr.bf16.mxu0 0
          %1210 = vmatpush1.bf16.msra.mxu0 0
          %1211 = vmatprep.subr.bf16.mxu0 0
          %1212 = vmatpush1.bf16.msra.mxu0 0
          %1213 = vmatprep.subr.bf16.mxu0 0
          %1214 = vmatpush1.bf16.msra.mxu0 0
          %1215 = vmatprep.subr.bf16.mxu0 0
          %1216 = vmatpush1.bf16.msra.mxu0 0
          %1217 = vmatprep.subr.bf16.mxu0 0
          %1218 = vmatpush1.bf16.msra.mxu0 0
          %1219 = vmatprep.subr.bf16.mxu0 0
          %1220 = vmatpush1.bf16.msra.mxu0 0
          %1221 = vmatprep.subr.bf16.mxu0 0
          %1222 = vmatpush1.bf16.msra.mxu0 0
          %1223 = vmatprep.subr.bf16.mxu0 0
          %1224 = vmatpush1.bf16.msra.mxu0 0
          %1225 = vmatprep.mubr.bf16.mxu0 0
          %1226 = vmatmul.mubr.bf16.gmra.mrb[0].mxu0 %v292
          %v1227 = vpop.f32.mrb[0].mxu0
          %v1228 = vadd.f32 0.0, %v1227
          %v1229 = vpop.f32.mrb[0].mxu0
          %v1230 = vpop.f32.mrb[0].mxu0
          %v1231 = vadd.f32 0.0, %v1230
          %v1232 = vpop.f32.mrb[0].mxu0
          %1233 = vmatprep.mubr.bf16.mxu0 0
          %1234 = vmatmul.mubr.bf16.gmra.mrb[0].mxu0 %v295
          %v1235 = vpop.f32.mrb[0].mxu0
          %v1236 = vadd.f32 0.0, %v1235
          %v1237 = vpop.f32.mrb[0].mxu0
          %v1238 = vpop.f32.mrb[0].mxu0
          %v1239 = vadd.f32 0.0, %v1238
          %v1240 = vpop.f32.mrb[0].mxu0
          %1241 = vmatprep.mubr.bf16.mxu0 0
          %1242 = vmatmul.mubr.bf16.gmra.mrb[0].mxu0 %v298
          %v1243 = vpop.f32.mrb[0].mxu0
          %v1244 = vadd.f32 0.0, %v1243
          %v1245 = vpop.f32.mrb[0].mxu0
          %v1246 = vpop.f32.mrb[0].mxu0
          %v1247 = vadd.f32 0.0, %v1246
          %v1248 = vpop.f32.mrb[0].mxu0
          %1249 = vmatprep.mubr.bf16.mxu0 0
          %1250 = vmatmul.mubr.bf16.gmra.mrb[0].mxu0 %v301
          %v1251 = vpop.f32.mrb[0].mxu0
          %v1252 = vadd.f32 0.0, %v1251
          %v1253 = vpop.f32.mrb[0].mxu0
          %v1254 = vpop.f32.mrb[0].mxu0
          %v1255 = vadd.f32 0.0, %v1254
          %v1256 = vpop.f32.mrb[0].mxu0
          %1257 = vdwg.mxu0
          %v1258 = vld [vmem:[%s369 + $0x8] sm:$0x1]
          %v1259 = vlaneseq
          %v1260 = vshrl.u32 %v1259, 7
          %v1261 = vsub.s32 0, %v1260
          %v1262 = vrot.slane %v1258, %v1261
          %v1263 = vsub.f32 %v1228, %v1262
          %v1264 = vsub.f32 %v1231, %v1262
          %v1265 = vsub.f32 %v1236, %v1262
          %v1266 = vsub.f32 %v1239, %v1262
          %v1267 = vsub.f32 %v1244, %v1262
          %v1268 = vsub.f32 %v1247, %v1262
          %v1269 = vsub.f32 %v1252, %v1262
          %v1270 = vsub.f32 %v1255, %v1262
          %v1271 = vand.u32 2147483647, %v1263
          %v1272 = vand.u32 2147483647, %v1264
          %v1273 = vand.u32 2147483647, %v1265
          %v1274 = vand.u32 2147483647, %v1266
          %v1275 = vand.u32 2147483647, %v1267
          %v1276 = vand.u32 2147483647, %v1268
          %v1277 = vand.u32 2147483647, %v1269
          %v1278 = vand.u32 2147483647, %v1270
          %v1279 = vadd.f32 %v1168, %v1271
          %v1280 = vadd.f32 %v1169, %v1272
          %v1281 = vadd.f32 %v1170, %v1273
          %v1282 = vadd.f32 %v1171, %v1274
          %v1283 = vadd.f32 %v1172, %v1275
          %v1284 = vadd.f32 %v1173, %v1276
          %v1285 = vadd.f32 %v1174, %v1277
          %v1286 = vadd.f32 %v1175, %v1278
          %s1287 = scalar_lea.vmem %s1, 144
          %v1288 = vld [vmem:[%s1287] sm:$0xf]
          %v1289 = vld [vmem:[%s1287 + $0x4] sm:$0xf]
          %v1290 = vld [vmem:[%s1287 + $0x8] sm:$0xf]
          %v1291 = vld [vmem:[%s1287 + $0xc] sm:$0xf]
          %v1296 = vunpack.c.l.b16 %v1288
          %v1297 = vunpack.c.l.b16 %v1289
          %v1298 = vunpack.c.l.b16 %v1290
          %v1299 = vunpack.c.l.b16 %v1291
          %v1300 = vpack.c.b16 %v1297, %v1296
          %v1301 = vpack.c.b16 %v1299, %v1298
          %1304 = vmatprep.subr.bf16.mxu0 0
          %1305 = vmatpush1.bf16.msra.mxu0 %v1300
          %1306 = vmatprep.subr.bf16.mxu0 0
          %1307 = vmatpush1.bf16.msra.mxu0 %v1301
          %1308 = vmatprep.subr.bf16.mxu0 0
          %1309 = vmatpush1.bf16.msra.mxu0 0
          %1310 = vmatprep.subr.bf16.mxu0 0
          %1311 = vmatpush1.bf16.msra.mxu0 0
          %1312 = vmatprep.subr.bf16.mxu0 0
          %1313 = vmatpush1.bf16.msra.mxu0 0
          %1314 = vmatprep.subr.bf16.mxu0 0
          %1315 = vmatpush1.bf16.msra.mxu0 0
          %1316 = vmatprep.subr.bf16.mxu0 0
          %1317 = vmatpush1.bf16.msra.mxu0 0
          %1318 = vmatprep.subr.bf16.mxu0 0
          %1319 = vmatpush1.bf16.msra.mxu0 0
          %1320 = vmatprep.subr.bf16.mxu0 0
          %1321 = vmatpush1.bf16.msra.mxu0 0
          %1322 = vmatprep.subr.bf16.mxu0 0
          %1323 = vmatpush1.bf16.msra.mxu0 0
          %1324 = vmatprep.subr.bf16.mxu0 0
          %1325 = vmatpush1.bf16.msra.mxu0 0
          %1326 = vmatprep.subr.bf16.mxu0 0
          %1327 = vmatpush1.bf16.msra.mxu0 0
          %1328 = vmatprep.subr.bf16.mxu0 0
          %1329 = vmatpush1.bf16.msra.mxu0 0
          %1330 = vmatprep.subr.bf16.mxu0 0
          %1331 = vmatpush1.bf16.msra.mxu0 0
          %1332 = vmatprep.subr.bf16.mxu0 0
          %1333 = vmatpush1.bf16.msra.mxu0 0
          %1334 = vmatprep.subr.bf16.mxu0 0
          %1335 = vmatpush1.bf16.msra.mxu0 0
          %1336 = vmatprep.mubr.bf16.mxu0 0
          %1337 = vmatmul.mubr.bf16.gmra.mrb[0].mxu0 %v292
          %v1338 = vpop.f32.mrb[0].mxu0
          %v1339 = vadd.f32 0.0, %v1338
          %v1340 = vpop.f32.mrb[0].mxu0
          %v1341 = vpop.f32.mrb[0].mxu0
          %v1342 = vadd.f32 0.0, %v1341
          %v1343 = vpop.f32.mrb[0].mxu0
          %1344 = vmatprep.mubr.bf16.mxu0 0
          %1345 = vmatmul.mubr.bf16.gmra.mrb[0].mxu0 %v295
          %v1346 = vpop.f32.mrb[0].mxu0
          %v1347 = vadd.f32 0.0, %v1346
          %v1348 = vpop.f32.mrb[0].mxu0
          %v1349 = vpop.f32.mrb[0].mxu0
          %v1350 = vadd.f32 0.0, %v1349
          %v1351 = vpop.f32.mrb[0].mxu0
          %1352 = vmatprep.mubr.bf16.mxu0 0
          %1353 = vmatmul.mubr.bf16.gmra.mrb[0].mxu0 %v298
          %v1354 = vpop.f32.mrb[0].mxu0
          %v1355 = vadd.f32 0.0, %v1354
          %v1356 = vpop.f32.mrb[0].mxu0
          %v1357 = vpop.f32.mrb[0].mxu0
          %v1358 = vadd.f32 0.0, %v1357
          %v1359 = vpop.f32.mrb[0].mxu0
          %1360 = vmatprep.mubr.bf16.mxu0 0
          %1361 = vmatmul.mubr.bf16.gmra.mrb[0].mxu0 %v301
          %v1362 = vpop.f32.mrb[0].mxu0
          %v1363 = vadd.f32 0.0, %v1362
          %v1364 = vpop.f32.mrb[0].mxu0
          %v1365 = vpop.f32.mrb[0].mxu0
          %v1366 = vadd.f32 0.0, %v1365
          %v1367 = vpop.f32.mrb[0].mxu0
          %1368 = vdwg.mxu0
          %v1369 = vld [vmem:[%s369 + $0x9] sm:$0x1]
          %v1370 = vlaneseq
          %v1371 = vshrl.u32 %v1370, 7
          %v1372 = vsub.s32 0, %v1371
          %v1373 = vrot.slane %v1369, %v1372
          %v1374 = vsub.f32 %v1339, %v1373
          %v1375 = vsub.f32 %v1342, %v1373
          %v1376 = vsub.f32 %v1347, %v1373
          %v1377 = vsub.f32 %v1350, %v1373
          %v1378 = vsub.f32 %v1355, %v1373
          %v1379 = vsub.f32 %v1358, %v1373
          %v1380 = vsub.f32 %v1363, %v1373
          %v1381 = vsub.f32 %v1366, %v1373
          %v1382 = vand.u32 2147483647, %v1374
          %v1383 = vand.u32 2147483647, %v1375
          %v1384 = vand.u32 2147483647, %v1376
          %v1385 = vand.u32 2147483647, %v1377
          %v1386 = vand.u32 2147483647, %v1378
          %v1387 = vand.u32 2147483647, %v1379
          %v1388 = vand.u32 2147483647, %v1380
          %v1389 = vand.u32 2147483647, %v1381
          %v1390 = vadd.f32 %v1279, %v1382
          %v1391 = vadd.f32 %v1280, %v1383
          %v1392 = vadd.f32 %v1281, %v1384
          %v1393 = vadd.f32 %v1282, %v1385
          %v1394 = vadd.f32 %v1283, %v1386
          %v1395 = vadd.f32 %v1284, %v1387
          %v1396 = vadd.f32 %v1285, %v1388
          %v1397 = vadd.f32 %v1286, %v1389
          %s1398 = scalar_lea.vmem %s1, 160
          %v1399 = vld [vmem:[%s1398] sm:$0xf]
          %v1400 = vld [vmem:[%s1398 + $0x4] sm:$0xf]
          %v1401 = vld [vmem:[%s1398 + $0x8] sm:$0xf]
          %v1402 = vld [vmem:[%s1398 + $0xc] sm:$0xf]
          %v1407 = vunpack.c.l.b16 %v1399
          %v1408 = vunpack.c.l.b16 %v1400
          %v1409 = vunpack.c.l.b16 %v1401
          %v1410 = vunpack.c.l.b16 %v1402
          %v1411 = vpack.c.b16 %v1408, %v1407
          %v1412 = vpack.c.b16 %v1410, %v1409
          %1415 = vmatprep.subr.bf16.mxu0 0
          %1416 = vmatpush1.bf16.msra.mxu0 %v1411
          %1417 = vmatprep.subr.bf16.mxu0 0
          %1418 = vmatpush1.bf16.msra.mxu0 %v1412
          %1419 = vmatprep.subr.bf16.mxu0 0
          %1420 = vmatpush1.bf16.msra.mxu0 0
          %1421 = vmatprep.subr.bf16.mxu0 0
          %1422 = vmatpush1.bf16.msra.mxu0 0
          %1423 = vmatprep.subr.bf16.mxu0 0
          %1424 = vmatpush1.bf16.msra.mxu0 0
          %1425 = vmatprep.subr.bf16.mxu0 0
          %1426 = vmatpush1.bf16.msra.mxu0 0
          %1427 = vmatprep.subr.bf16.mxu0 0
          %1428 = vmatpush1.bf16.msra.mxu0 0
          %1429 = vmatprep.subr.bf16.mxu0 0
          %1430 = vmatpush1.bf16.msra.mxu0 0
          %1431 = vmatprep.subr.bf16.mxu0 0
          %1432 = vmatpush1.bf16.msra.mxu0 0
          %1433 = vmatprep.subr.bf16.mxu0 0
          %1434 = vmatpush1.bf16.msra.mxu0 0
          %1435 = vmatprep.subr.bf16.mxu0 0
          %1436 = vmatpush1.bf16.msra.mxu0 0
          %1437 = vmatprep.subr.bf16.mxu0 0
          %1438 = vmatpush1.bf16.msra.mxu0 0
          %1439 = vmatprep.subr.bf16.mxu0 0
          %1440 = vmatpush1.bf16.msra.mxu0 0
          %1441 = vmatprep.subr.bf16.mxu0 0
          %1442 = vmatpush1.bf16.msra.mxu0 0
          %1443 = vmatprep.subr.bf16.mxu0 0
          %1444 = vmatpush1.bf16.msra.mxu0 0
          %1445 = vmatprep.subr.bf16.mxu0 0
          %1446 = vmatpush1.bf16.msra.mxu0 0
          %1447 = vmatprep.mubr.bf16.mxu0 0
          %1448 = vmatmul.mubr.bf16.gmra.mrb[0].mxu0 %v292
          %v1449 = vpop.f32.mrb[0].mxu0
          %v1450 = vadd.f32 0.0, %v1449
          %v1451 = vpop.f32.mrb[0].mxu0
          %v1452 = vpop.f32.mrb[0].mxu0
          %v1453 = vadd.f32 0.0, %v1452
          %v1454 = vpop.f32.mrb[0].mxu0
          %1455 = vmatprep.mubr.bf16.mxu0 0
          %1456 = vmatmul.mubr.bf16.gmra.mrb[0].mxu0 %v295
          %v1457 = vpop.f32.mrb[0].mxu0
          %v1458 = vadd.f32 0.0, %v1457
          %v1459 = vpop.f32.mrb[0].mxu0
          %v1460 = vpop.f32.mrb[0].mxu0
          %v1461 = vadd.f32 0.0, %v1460
          %v1462 = vpop.f32.mrb[0].mxu0
          %1463 = vmatprep.mubr.bf16.mxu0 0
          %1464 = vmatmul.mubr.bf16.gmra.mrb[0].mxu0 %v298
          %v1465 = vpop.f32.mrb[0].mxu0
          %v1466 = vadd.f32 0.0, %v1465
          %v1467 = vpop.f32.mrb[0].mxu0
          %v1468 = vpop.f32.mrb[0].mxu0
          %v1469 = vadd.f32 0.0, %v1468
          %v1470 = vpop.f32.mrb[0].mxu0
          %1471 = vmatprep.mubr.bf16.mxu0 0
          %1472 = vmatmul.mubr.bf16.gmra.mrb[0].mxu0 %v301
          %v1473 = vpop.f32.mrb[0].mxu0
          %v1474 = vadd.f32 0.0, %v1473
          %v1475 = vpop.f32.mrb[0].mxu0
          %v1476 = vpop.f32.mrb[0].mxu0
          %v1477 = vadd.f32 0.0, %v1476
          %v1478 = vpop.f32.mrb[0].mxu0
          %1479 = vdwg.mxu0
          %v1480 = vld [vmem:[%s369 + $0xa] sm:$0x1]
          %v1481 = vlaneseq
          %v1482 = vshrl.u32 %v1481, 7
          %v1483 = vsub.s32 0, %v1482
          %v1484 = vrot.slane %v1480, %v1483
          %v1485 = vsub.f32 %v1450, %v1484
          %v1486 = vsub.f32 %v1453, %v1484
          %v1487 = vsub.f32 %v1458, %v1484
          %v1488 = vsub.f32 %v1461, %v1484
          %v1489 = vsub.f32 %v1466, %v1484
          %v1490 = vsub.f32 %v1469, %v1484
          %v1491 = vsub.f32 %v1474, %v1484
          %v1492 = vsub.f32 %v1477, %v1484
          %v1493 = vand.u32 2147483647, %v1485
          %v1494 = vand.u32 2147483647, %v1486
          %v1495 = vand.u32 2147483647, %v1487
          %v1496 = vand.u32 2147483647, %v1488
          %v1497 = vand.u32 2147483647, %v1489
          %v1498 = vand.u32 2147483647, %v1490
          %v1499 = vand.u32 2147483647, %v1491
          %v1500 = vand.u32 2147483647, %v1492
          %v1501 = vadd.f32 %v1390, %v1493
          %v1502 = vadd.f32 %v1391, %v1494
          %v1503 = vadd.f32 %v1392, %v1495
          %v1504 = vadd.f32 %v1393, %v1496
          %v1505 = vadd.f32 %v1394, %v1497
          %v1506 = vadd.f32 %v1395, %v1498
          %v1507 = vadd.f32 %v1396, %v1499
          %v1508 = vadd.f32 %v1397, %v1500
          %s1509 = scalar_lea.vmem %s1, 176
          %v1510 = vld [vmem:[%s1509] sm:$0xf]
          %v1511 = vld [vmem:[%s1509 + $0x4] sm:$0xf]
          %v1512 = vld [vmem:[%s1509 + $0x8] sm:$0xf]
          %v1513 = vld [vmem:[%s1509 + $0xc] sm:$0xf]
          %v1518 = vunpack.c.l.b16 %v1510
          %v1519 = vunpack.c.l.b16 %v1511
          %v1520 = vunpack.c.l.b16 %v1512
          %v1521 = vunpack.c.l.b16 %v1513
          %v1522 = vpack.c.b16 %v1519, %v1518
          %v1523 = vpack.c.b16 %v1521, %v1520
          %1526 = vmatprep.subr.bf16.mxu0 0
          %1527 = vmatpush1.bf16.msra.mxu0 %v1522
          %1528 = vmatprep.subr.bf16.mxu0 0
          %1529 = vmatpush1.bf16.msra.mxu0 %v1523
          %1530 = vmatprep.subr.bf16.mxu0 0
          %1531 = vmatpush1.bf16.msra.mxu0 0
          %1532 = vmatprep.subr.bf16.mxu0 0
          %1533 = vmatpush1.bf16.msra.mxu0 0
          %1534 = vmatprep.subr.bf16.mxu0 0
          %1535 = vmatpush1.bf16.msra.mxu0 0
          %1536 = vmatprep.subr.bf16.mxu0 0
          %1537 = vmatpush1.bf16.msra.mxu0 0
          %1538 = vmatprep.subr.bf16.mxu0 0
          %1539 = vmatpush1.bf16.msra.mxu0 0
          %1540 = vmatprep.subr.bf16.mxu0 0
          %1541 = vmatpush1.bf16.msra.mxu0 0
          %1542 = vmatprep.subr.bf16.mxu0 0
          %1543 = vmatpush1.bf16.msra.mxu0 0
          %1544 = vmatprep.subr.bf16.mxu0 0
          %1545 = vmatpush1.bf16.msra.mxu0 0
          %1546 = vmatprep.subr.bf16.mxu0 0
          %1547 = vmatpush1.bf16.msra.mxu0 0
          %1548 = vmatprep.subr.bf16.mxu0 0
          %1549 = vmatpush1.bf16.msra.mxu0 0
          %1550 = vmatprep.subr.bf16.mxu0 0
          %1551 = vmatpush1.bf16.msra.mxu0 0
          %1552 = vmatprep.subr.bf16.mxu0 0
          %1553 = vmatpush1.bf16.msra.mxu0 0
          %1554 = vmatprep.subr.bf16.mxu0 0
          %1555 = vmatpush1.bf16.msra.mxu0 0
          %1556 = vmatprep.subr.bf16.mxu0 0
          %1557 = vmatpush1.bf16.msra.mxu0 0
          %1558 = vmatprep.mubr.bf16.mxu0 0
          %1559 = vmatmul.mubr.bf16.gmra.mrb[0].mxu0 %v292
          %v1560 = vpop.f32.mrb[0].mxu0
          %v1561 = vadd.f32 0.0, %v1560
          %v1562 = vpop.f32.mrb[0].mxu0
          %v1563 = vpop.f32.mrb[0].mxu0
          %v1564 = vadd.f32 0.0, %v1563
          %v1565 = vpop.f32.mrb[0].mxu0
          %1566 = vmatprep.mubr.bf16.mxu0 0
          %1567 = vmatmul.mubr.bf16.gmra.mrb[0].mxu0 %v295
          %v1568 = vpop.f32.mrb[0].mxu0
          %v1569 = vadd.f32 0.0, %v1568
          %v1570 = vpop.f32.mrb[0].mxu0
          %v1571 = vpop.f32.mrb[0].mxu0
          %v1572 = vadd.f32 0.0, %v1571
          %v1573 = vpop.f32.mrb[0].mxu0
          %1574 = vmatprep.mubr.bf16.mxu0 0
          %1575 = vmatmul.mubr.bf16.gmra.mrb[0].mxu0 %v298
          %v1576 = vpop.f32.mrb[0].mxu0
          %v1577 = vadd.f32 0.0, %v1576
          %v1578 = vpop.f32.mrb[0].mxu0
          %v1579 = vpop.f32.mrb[0].mxu0
          %v1580 = vadd.f32 0.0, %v1579
          %v1581 = vpop.f32.mrb[0].mxu0
          %1582 = vmatprep.mubr.bf16.mxu0 0
          %1583 = vmatmul.mubr.bf16.gmra.mrb[0].mxu0 %v301
          %v1584 = vpop.f32.mrb[0].mxu0
          %v1585 = vadd.f32 0.0, %v1584
          %v1586 = vpop.f32.mrb[0].mxu0
          %v1587 = vpop.f32.mrb[0].mxu0
          %v1588 = vadd.f32 0.0, %v1587
          %v1589 = vpop.f32.mrb[0].mxu0
          %1590 = vdwg.mxu0
          %v1591 = vld [vmem:[%s369 + $0xb] sm:$0x1]
          %v1592 = vlaneseq
          %v1593 = vshrl.u32 %v1592, 7
          %v1594 = vsub.s32 0, %v1593
          %v1595 = vrot.slane %v1591, %v1594
          %v1596 = vsub.f32 %v1561, %v1595
          %v1597 = vsub.f32 %v1564, %v1595
          %v1598 = vsub.f32 %v1569, %v1595
          %v1599 = vsub.f32 %v1572, %v1595
          %v1600 = vsub.f32 %v1577, %v1595
          %v1601 = vsub.f32 %v1580, %v1595
          %v1602 = vsub.f32 %v1585, %v1595
          %v1603 = vsub.f32 %v1588, %v1595
          %v1604 = vand.u32 2147483647, %v1596
          %v1605 = vand.u32 2147483647, %v1597
          %v1606 = vand.u32 2147483647, %v1598
          %v1607 = vand.u32 2147483647, %v1599
          %v1608 = vand.u32 2147483647, %v1600
          %v1609 = vand.u32 2147483647, %v1601
          %v1610 = vand.u32 2147483647, %v1602
          %v1611 = vand.u32 2147483647, %v1603
          %v1612 = vadd.f32 %v1501, %v1604
          %v1613 = vadd.f32 %v1502, %v1605
          %v1614 = vadd.f32 %v1503, %v1606
          %v1615 = vadd.f32 %v1504, %v1607
          %v1616 = vadd.f32 %v1505, %v1608
          %v1617 = vadd.f32 %v1506, %v1609
          %v1618 = vadd.f32 %v1507, %v1610
          %v1619 = vadd.f32 %v1508, %v1611
          %s1620 = scalar_lea.vmem %s1, 192
          %v1621 = vld [vmem:[%s1620] sm:$0xf]
          %v1622 = vld [vmem:[%s1620 + $0x4] sm:$0xf]
          %v1623 = vld [vmem:[%s1620 + $0x8] sm:$0xf]
          %v1624 = vld [vmem:[%s1620 + $0xc] sm:$0xf]
          %v1629 = vunpack.c.l.b16 %v1621
          %v1630 = vunpack.c.l.b16 %v1622
          %v1631 = vunpack.c.l.b16 %v1623
          %v1632 = vunpack.c.l.b16 %v1624
          %v1633 = vpack.c.b16 %v1630, %v1629
          %v1634 = vpack.c.b16 %v1632, %v1631
          %1637 = vmatprep.subr.bf16.mxu0 0
          %1638 = vmatpush1.bf16.msra.mxu0 %v1633
          %1639 = vmatprep.subr.bf16.mxu0 0
          %1640 = vmatpush1.bf16.msra.mxu0 %v1634
          %1641 = vmatprep.subr.bf16.mxu0 0
          %1642 = vmatpush1.bf16.msra.mxu0 0
          %1643 = vmatprep.subr.bf16.mxu0 0
          %1644 = vmatpush1.bf16.msra.mxu0 0
          %1645 = vmatprep.subr.bf16.mxu0 0
          %1646 = vmatpush1.bf16.msra.mxu0 0
          %1647 = vmatprep.subr.bf16.mxu0 0
          %1648 = vmatpush1.bf16.msra.mxu0 0
          %1649 = vmatprep.subr.bf16.mxu0 0
          %1650 = vmatpush1.bf16.msra.mxu0 0
          %1651 = vmatprep.subr.bf16.mxu0 0
          %1652 = vmatpush1.bf16.msra.mxu0 0
          %1653 = vmatprep.subr.bf16.mxu0 0
          %1654 = vmatpush1.bf16.msra.mxu0 0
          %1655 = vmatprep.subr.bf16.mxu0 0
          %1656 = vmatpush1.bf16.msra.mxu0 0
          %1657 = vmatprep.subr.bf16.mxu0 0
          %1658 = vmatpush1.bf16.msra.mxu0 0
          %1659 = vmatprep.subr.bf16.mxu0 0
          %1660 = vmatpush1.bf16.msra.mxu0 0
          %1661 = vmatprep.subr.bf16.mxu0 0
          %1662 = vmatpush1.bf16.msra.mxu0 0
          %1663 = vmatprep.subr.bf16.mxu0 0
          %1664 = vmatpush1.bf16.msra.mxu0 0
          %1665 = vmatprep.subr.bf16.mxu0 0
          %1666 = vmatpush1.bf16.msra.mxu0 0
          %1667 = vmatprep.subr.bf16.mxu0 0
          %1668 = vmatpush1.bf16.msra.mxu0 0
          %1669 = vmatprep.mubr.bf16.mxu0 0
          %1670 = vmatmul.mubr.bf16.gmra.mrb[0].mxu0 %v292
          %v1671 = vpop.f32.mrb[0].mxu0
          %v1672 = vadd.f32 0.0, %v1671
          %v1673 = vpop.f32.mrb[0].mxu0
          %v1674 = vpop.f32.mrb[0].mxu0
          %v1675 = vadd.f32 0.0, %v1674
          %v1676 = vpop.f32.mrb[0].mxu0
          %1677 = vmatprep.mubr.bf16.mxu0 0
          %1678 = vmatmul.mubr.bf16.gmra.mrb[0].mxu0 %v295
          %v1679 = vpop.f32.mrb[0].mxu0
          %v1680 = vadd.f32 0.0, %v1679
          %v1681 = vpop.f32.mrb[0].mxu0
          %v1682 = vpop.f32.mrb[0].mxu0
          %v1683 = vadd.f32 0.0, %v1682
          %v1684 = vpop.f32.mrb[0].mxu0
          %1685 = vmatprep.mubr.bf16.mxu0 0
          %1686 = vmatmul.mubr.bf16.gmra.mrb[0].mxu0 %v298
          %v1687 = vpop.f32.mrb[0].mxu0
          %v1688 = vadd.f32 0.0, %v1687
          %v1689 = vpop.f32.mrb[0].mxu0
          %v1690 = vpop.f32.mrb[0].mxu0
          %v1691 = vadd.f32 0.0, %v1690
          %v1692 = vpop.f32.mrb[0].mxu0
          %1693 = vmatprep.mubr.bf16.mxu0 0
          %1694 = vmatmul.mubr.bf16.gmra.mrb[0].mxu0 %v301
          %v1695 = vpop.f32.mrb[0].mxu0
          %v1696 = vadd.f32 0.0, %v1695
          %v1697 = vpop.f32.mrb[0].mxu0
          %v1698 = vpop.f32.mrb[0].mxu0
          %v1699 = vadd.f32 0.0, %v1698
          %v1700 = vpop.f32.mrb[0].mxu0
          %1701 = vdwg.mxu0
          %v1702 = vld [vmem:[%s369 + $0xc] sm:$0x1]
          %v1703 = vlaneseq
          %v1704 = vshrl.u32 %v1703, 7
          %v1705 = vsub.s32 0, %v1704
          %v1706 = vrot.slane %v1702, %v1705
          %v1707 = vsub.f32 %v1672, %v1706
          %v1708 = vsub.f32 %v1675, %v1706
          %v1709 = vsub.f32 %v1680, %v1706
          %v1710 = vsub.f32 %v1683, %v1706
          %v1711 = vsub.f32 %v1688, %v1706
          %v1712 = vsub.f32 %v1691, %v1706
          %v1713 = vsub.f32 %v1696, %v1706
          %v1714 = vsub.f32 %v1699, %v1706
          %v1715 = vand.u32 2147483647, %v1707
          %v1716 = vand.u32 2147483647, %v1708
          %v1717 = vand.u32 2147483647, %v1709
          %v1718 = vand.u32 2147483647, %v1710
          %v1719 = vand.u32 2147483647, %v1711
          %v1720 = vand.u32 2147483647, %v1712
          %v1721 = vand.u32 2147483647, %v1713
          %v1722 = vand.u32 2147483647, %v1714
          %v1723 = vadd.f32 %v1612, %v1715
          %v1724 = vadd.f32 %v1613, %v1716
          %v1725 = vadd.f32 %v1614, %v1717
          %v1726 = vadd.f32 %v1615, %v1718
          %v1727 = vadd.f32 %v1616, %v1719
          %v1728 = vadd.f32 %v1617, %v1720
          %v1729 = vadd.f32 %v1618, %v1721
          %v1730 = vadd.f32 %v1619, %v1722
          %1739 = vrot.lane.b32.xlu0 %v1723, 64
          %v1740 = vpop.permute.xlu0 %1739
          %1741 = vrot.lane.b32.xlu0 %v1724, 64
          %v1742 = vpop.permute.xlu0 %1741
          %1743 = vrot.lane.b32.xlu0 %v1725, 64
          %v1744 = vpop.permute.xlu0 %1743
          %1745 = vrot.lane.b32.xlu0 %v1726, 64
          %v1746 = vpop.permute.xlu0 %1745
          %1747 = vrot.lane.b32.xlu0 %v1727, 64
          %v1748 = vpop.permute.xlu0 %1747
          %1749 = vrot.lane.b32.xlu0 %v1728, 64
          %v1750 = vpop.permute.xlu0 %1749
          %1751 = vrot.lane.b32.xlu0 %v1729, 64
          %v1752 = vpop.permute.xlu0 %1751
          %1753 = vrot.lane.b32.xlu0 %v1730, 64
          %v1754 = vpop.permute.xlu0 %1753
          %v1763 = vadd.f32 %v1723, %v1740
          %v1764 = vadd.f32 %v1724, %v1742
          %v1765 = vadd.f32 %v1725, %v1744
          %v1766 = vadd.f32 %v1726, %v1746
          %v1767 = vadd.f32 %v1727, %v1748
          %v1768 = vadd.f32 %v1728, %v1750
          %v1769 = vadd.f32 %v1729, %v1752
          %v1770 = vadd.f32 %v1730, %v1754
          %vm1771 = vcmask 523264
          %v1772 = vsel %vm1771, %v1763, inf
          %1773 = vmin.xlane.f32.xlu0 %v1772
          %v1774 = vpop.xlane.xlu0 %1773
          %v1775 = vsel %vm1771, %v1764, inf
          %1776 = vmin.xlane.f32.xlu0 %v1775
          %v1777 = vpop.xlane.xlu0 %1776
          %v1778 = vsel %vm1771, %v1765, inf
          %1779 = vmin.xlane.f32.xlu0 %v1778
          %v1780 = vpop.xlane.xlu0 %1779
          %v1781 = vsel %vm1771, %v1766, inf
          %1782 = vmin.xlane.f32.xlu0 %v1781
          %v1783 = vpop.xlane.xlu0 %1782
          %v1784 = vsel %vm1771, %v1767, inf
          %1785 = vmin.xlane.f32.xlu0 %v1784
          %v1786 = vpop.xlane.xlu0 %1785
          %v1787 = vsel %vm1771, %v1768, inf
          %1788 = vmin.xlane.f32.xlu0 %v1787
          %v1789 = vpop.xlane.xlu0 %1788
          %v1790 = vsel %vm1771, %v1769, inf
          %1791 = vmin.xlane.f32.xlu0 %v1790
          %v1792 = vpop.xlane.xlu0 %1791
          %v1793 = vsel %vm1771, %v1770, inf
          %1794 = vmin.xlane.f32.xlu0 %v1793
          %v1795 = vpop.xlane.xlu0 %1794
          %v1796 = vadd.f32 %v1774, 1e-05
          %v1797 = vadd.f32 %v1777, 1e-05
          %v1798 = vadd.f32 %v1780, 1e-05
          %v1799 = vadd.f32 %v1783, 1e-05
          %v1800 = vadd.f32 %v1786, 1e-05
          %v1801 = vadd.f32 %v1789, 1e-05
          %v1802 = vadd.f32 %v1792, 1e-05
          %v1803 = vadd.f32 %v1795, 1e-05
          %v1804 = vrcp.pop %v1796
          %v1805 = vmul.f32 1.0, %v1804
          %v1806 = vrcp.pop %v1797
          %v1807 = vmul.f32 1.0, %v1806
          %v1808 = vrcp.pop %v1798
          %v1809 = vmul.f32 1.0, %v1808
          %v1810 = vrcp.pop %v1799
          %v1811 = vmul.f32 1.0, %v1810
          %v1812 = vrcp.pop %v1800
          %v1813 = vmul.f32 1.0, %v1812
          %v1814 = vrcp.pop %v1801
          %v1815 = vmul.f32 1.0, %v1814
          %v1816 = vrcp.pop %v1802
          %v1817 = vmul.f32 1.0, %v1816
          %v1818 = vrcp.pop %v1803
          %v1819 = vmul.f32 1.0, %v1818
          %v1820 = vmul.f32 %v1763, %v1805
          %v1821 = vmul.f32 %v1764, %v1807
          %v1822 = vmul.f32 %v1765, %v1809
          %v1823 = vmul.f32 %v1766, %v1811
          %v1824 = vmul.f32 %v1767, %v1813
          %v1825 = vmul.f32 %v1768, %v1815
          %v1826 = vmul.f32 %v1769, %v1817
          %v1827 = vmul.f32 %v1770, %v1819
          %v1828 = vsub.f32 1.0, %v1820
          %v1829 = vsub.f32 1.0, %v1821
          %v1830 = vsub.f32 1.0, %v1822
          %v1831 = vsub.f32 1.0, %v1823
          %v1832 = vsub.f32 1.0, %v1824
          %v1833 = vsub.f32 1.0, %v1825
          %v1834 = vsub.f32 1.0, %v1826
          %v1835 = vsub.f32 1.0, %v1827
          %v1836 = vmul.f32 %v1828, 2.0
          %v1837 = vmul.f32 %v1829, 2.0
          %v1838 = vmul.f32 %v1830, 2.0
          %v1839 = vmul.f32 %v1831, 2.0
          %v1840 = vmul.f32 %v1832, 2.0
          %v1841 = vmul.f32 %v1833, 2.0
          %v1842 = vmul.f32 %v1834, 2.0
          %v1843 = vmul.f32 %v1835, 2.0
          %v1844 = vmul.f32 %v1836, 1.442695
          %v1845 = vpow.pop %v1844
          %v1846 = vmul.f32 %v1837, 1.442695
          %v1847 = vpow.pop %v1846
          %v1848 = vmul.f32 %v1838, 1.442695
          %v1849 = vpow.pop %v1848
          %v1850 = vmul.f32 %v1839, 1.442695
          %v1851 = vpow.pop %v1850
          %v1852 = vmul.f32 %v1840, 1.442695
          %v1853 = vpow.pop %v1852
          %v1854 = vmul.f32 %v1841, 1.442695
          %v1855 = vpow.pop %v1854
          %v1856 = vmul.f32 %v1842, 1.442695
          %v1857 = vpow.pop %v1856
          %v1858 = vmul.f32 %v1843, 1.442695
          %v1859 = vpow.pop %v1858
          %v1860 = vsel %vm1771, %v1845, 0.0
          %1861 = vadd.xlane.f32.xlu0 %v1860
          %v1862 = vpop.xlane.xlu0 %1861
          %v1863 = vsel %vm1771, %v1847, 0.0
          %1864 = vadd.xlane.f32.xlu0 %v1863
          %v1865 = vpop.xlane.xlu0 %1864
          %v1866 = vsel %vm1771, %v1849, 0.0
          %1867 = vadd.xlane.f32.xlu0 %v1866
          %v1868 = vpop.xlane.xlu0 %1867
          %v1869 = vsel %vm1771, %v1851, 0.0
          %1870 = vadd.xlane.f32.xlu0 %v1869
          %v1871 = vpop.xlane.xlu0 %1870
          %v1872 = vsel %vm1771, %v1853, 0.0
          %1873 = vadd.xlane.f32.xlu0 %v1872
          %v1874 = vpop.xlane.xlu0 %1873
          %v1875 = vsel %vm1771, %v1855, 0.0
          %1876 = vadd.xlane.f32.xlu0 %v1875
          %v1877 = vpop.xlane.xlu0 %1876
          %v1878 = vsel %vm1771, %v1857, 0.0
          %1879 = vadd.xlane.f32.xlu0 %v1878
          %v1880 = vpop.xlane.xlu0 %1879
          %v1881 = vsel %vm1771, %v1859, 0.0
          %1882 = vadd.xlane.f32.xlu0 %v1881
          %v1883 = vpop.xlane.xlu0 %1882
          %v1884 = vrcp.pop %v1862
          %v1885 = vrcp.pop %v1865
          %v1886 = vrcp.pop %v1868
          %v1887 = vrcp.pop %v1871
          %v1888 = vrcp.pop %v1874
          %v1889 = vrcp.pop %v1877
          %v1890 = vrcp.pop %v1880
          %v1891 = vrcp.pop %v1883
          %v1892 = vmul.f32 %v1884, 0.9
          %v1893 = vmul.f32 %v1885, 0.9
          %v1894 = vmul.f32 %v1886, 0.9
          %v1895 = vmul.f32 %v1887, 0.9
          %v1896 = vmul.f32 %v1888, 0.9
          %v1897 = vmul.f32 %v1889, 0.9
          %v1898 = vmul.f32 %v1890, 0.9
          %v1899 = vmul.f32 %v1891, 0.9
          %v1900 = vmul.f32 %v1845, %v1892
          %v1901 = vmul.f32 %v1847, %v1893
          %v1902 = vmul.f32 %v1849, %v1894
          %v1903 = vmul.f32 %v1851, %v1895
          %v1904 = vmul.f32 %v1853, %v1896
          %v1905 = vmul.f32 %v1855, %v1897
          %v1906 = vmul.f32 %v1857, %v1898
          %v1907 = vmul.f32 %v1859, %v1899
          %v1908 = vadd.f32 %v1900, %v226
          %v1909 = vadd.f32 %v1901, %v227
          %v1910 = vadd.f32 %v1902, %v228
          %v1911 = vadd.f32 %v1903, %v229
          %v1912 = vadd.f32 %v1904, %v230
          %v1913 = vadd.f32 %v1905, %v231
          %v1914 = vadd.f32 %v1906, %v232
          %v1915 = vadd.f32 %v1907, %v233
          %v1916 = vsel %vm1771, %v1908, -inf
          %1917 = vmax.xlane.f32.xlu0 %v1916
          %v1918 = vpop.xlane.xlu0 %1917
          %v1919 = vsel %vm1771, %v1909, -inf
          %1920 = vmax.xlane.f32.xlu0 %v1919
          %v1921 = vpop.xlane.xlu0 %1920
          %v1922 = vsel %vm1771, %v1910, -inf
          %1923 = vmax.xlane.f32.xlu0 %v1922
          %v1924 = vpop.xlane.xlu0 %1923
          %v1925 = vsel %vm1771, %v1911, -inf
          %1926 = vmax.xlane.f32.xlu0 %v1925
          %v1927 = vpop.xlane.xlu0 %1926
          %v1928 = vsel %vm1771, %v1912, -inf
          %1929 = vmax.xlane.f32.xlu0 %v1928
          %v1930 = vpop.xlane.xlu0 %1929
          %v1931 = vsel %vm1771, %v1913, -inf
          %1932 = vmax.xlane.f32.xlu0 %v1931
          %v1933 = vpop.xlane.xlu0 %1932
          %v1934 = vsel %vm1771, %v1914, -inf
          %1935 = vmax.xlane.f32.xlu0 %v1934
          %v1936 = vpop.xlane.xlu0 %1935
          %v1937 = vsel %vm1771, %v1915, -inf
          %1938 = vmax.xlane.f32.xlu0 %v1937
          %v1939 = vpop.xlane.xlu0 %1938
          %v1940 = vadd.f32 %v1918, %v1921
          %v1941 = vadd.f32 %v1940, %v1924
          %v1942 = vadd.f32 %v1941, %v1927
          %v1943 = vadd.f32 %v1942, %v1930
          %v1944 = vadd.f32 %v1943, %v1933
          %v1945 = vadd.f32 %v1944, %v1936
          %v1946 = vadd.f32 %v1945, %v1939
          %v1947 = vrot.slane %v1946, 4
          %v1948 = vadd.f32 %v1946, %v1947
          %v1949 = vrot.slane %v1948, 2
          %v1950 = vadd.f32 %v1948, %v1949
          %v1951 = vrot.slane %v1950, 1
          %v1952 = vadd.f32 %v1950, %v1951
          %v1953 = vmul.f32 %v1952, 0.015625
          %v1954 = vstv %s237
          %vm1955 = vcmp.eq.s32.totalorder %v235, %v1954
          %v1956 = vsel %vm1955, %v1953, %v242
        $region41: #{tpu_custom_call.1} parent=35 // loop_footer
          %s241 = sadd.s32 1, %s237
        $region42: #{tpu_custom_call.1} parent=35 // loop_footer_branch
          %236 = sbr.rel target = $region38
        $region43: #{tpu_custom_call.1} parent=35 // loop_exit
          _
        %vm1957 = vcmask 57344
        %1958 = vst.msk [vmem:[%s210] sm:$0x1] %vm1957, %v242
        %s1959 = sand.u32 %s120, 1
        %s1960 = scalar_lea.sflag [#allocation3], %s1959
        %s1961 = sand.u32 %s120, 1
        %s1962 = scalar_lea.vmem [#allocation2], %s1961
        // Predicated region
        $region44: #{tpu_custom_call.1} parent=35 // pred_check
          %p1963 = pneg %p130
        $region45: #{tpu_custom_call.1} parent=35 // pred_check_branch
          %1965 = sbr.rel (%p1963) target = $region47
        $region46: #{tpu_custom_call.1} parent=35 // pred_region
          %s1967 = ssub.s32 16, 16
          %1968 = vsyncadd %s1960, %s1967
          %s1969 = smul.addr %s18, 16
          %s1970 = scalar_lea.hbm %s4, %s1969
          %s1972 = sshll.u32 %s1962, 4
          %s1973 = int_to_ptr.vmem [resolvable:$true] %s1972
          %1975 = dma.vmem_to_hbm [thread:$0]  %s1973, 16, %s1970, %s1960
        $region47: #{tpu_custom_call.1} parent=35 // pred_fallthru
          _
      $region36: #{tpu_custom_call.1} parent=5 // pred_fallthru
        _
      %p1976 = scmp.le.s32.totalorder 2, %s13
      // Predicated region
      $region48: #{tpu_custom_call.1} parent=5 // pred_check
        %p1977 = pneg %p1976
      $region49: #{tpu_custom_call.1} parent=5 // pred_check_branch
        %1979 = sbr.rel (%p1977) target = $region51
      $region50: #{tpu_custom_call.1} parent=5 // pred_region
        %s1980 = ssub.s32 %s13, 2
        // Predicated region
        $region52: #{tpu_custom_call.1} parent=50 // pred_check
          %p1981 = pneg %p136
        $region53: #{tpu_custom_call.1} parent=50 // pred_check_branch
          %1983 = sbr.rel (%p1981) target = $region55
        $region54: #{tpu_custom_call.1} parent=50 // pred_region
          %s1984 = sand.u32 %s121, 1
          %s1985 = scalar_lea.sflag [#allocation3], %s1984
          %s1986 = sand.u32 %s121, 1
          %s1987 = scalar_lea.vmem [#allocation2], %s1986
          %1988 = dma.done %s1985, 16
        $region55: #{tpu_custom_call.1} parent=50 // pred_fallthru
          _
      $region51: #{tpu_custom_call.1} parent=5 // pred_fallthru
        _
    $region6: #{tpu_custom_call.1} parent=1 // loop_footer
      %s17 = sadd.s32 1, %s13
    $region7: #{tpu_custom_call.1} parent=1 // loop_footer_branch
      %12 = sbr.rel target = $region3
    $region8: #{tpu_custom_call.1} parent=1 // loop_exit
      _
    %1989 = vsyncpa [#allocation3], 1
    %s1990 = scalar_lea.sflag [#allocation3], 1
    %1991 = vsyncpa %s1990, 1

</llo_original>
